<compile_context>
chip_gen: v6e
topology: v6e:2x2x1
jax: 0.10.0
libtpu: 0.0.40
codegen_flags: <defaults>
</compile_context>

<pallas_src>
import jax
import jax.numpy as jnp
from jax.experimental import pallas as pl
from jax.experimental.pallas import tpu as pltpu

EPS = 1e-5        # config.norm_eps
C_CONST = 8.0     # RGLRU `self.c`
CHUNK = 8         # timesteps per scan iteration (one f32 sublane tile)
PAD = 8           # zero-pad rows in the causal-conv scratch


def _rms_scale(v):
    return v * jax.lax.rsqrt(jnp.mean(v * v, axis=-1, keepdims=True) + EPS)


def _rmsnorm(v, w):
    return _rms_scale(v) * w


def hawk_kernel(x_ref, win_blk_ref, conv_ref, win_rg_ref, neg_c_asp_ref,
                wout_blk_ref, w13_ref, w2_ref,
                o_ref, pad_scr, a_scr, b_scr):
    Bt, S, D = x_ref.shape
    H = wout_blk_ref.shape[0]
    K = conv_ref.shape[0]
    F = w13_ref.shape[1] // 2
    M = Bt * S

    x = x_ref[...]                                              # (Bt, S, D) f32

    # ---- RGLRU block branch: RMSNorm (gain folded into W_in) -> W_in --------
    h1 = _rms_scale(x)
    z = jnp.dot(h1.reshape(M, D).astype(jnp.bfloat16), win_blk_ref[...],
                preferred_element_type=jnp.float32)             # (M, 2H) f32
    out1 = z[:, :H].reshape(Bt, S, H)
    out2 = z[:, H:].reshape(Bt, S, H)

    # ---- causal depthwise conv1d: padded scratch + static slices ------------
    pad_scr[:, 0:PAD, :] = jnp.zeros((Bt, PAD, H), jnp.float32)
    pad_scr[:, PAD:PAD + S, :] = out2
    xc = jnp.zeros((Bt, S, H), jnp.float32)
    for s in range(K):                      # tap (K-1-s) multiplies out2[t - s]
        tap = conv_ref[K - 1 - s:K - s, :]                      # (1, H)
        xc = xc + tap * pad_scr[:, PAD - s:PAD - s + S, :]

    # ---- RG-LRU gates --------------------------------------------------------
    zg = jnp.dot(xc.reshape(M, H).astype(jnp.bfloat16), win_rg_ref[...],
                 preferred_element_type=jnp.float32)            # (M, 2H) f32
    gate_x = jax.nn.sigmoid(zg[:, :H]).reshape(Bt, S, H)
    gate_a = jax.nn.sigmoid(zg[:, H:]).reshape(Bt, S, H)
    log_a = neg_c_asp_ref[...] * gate_a          # (1,H)=-c*softplus(a), precomputed
    a_t = jnp.exp(log_a)
    mult = jnp.sqrt(jnp.maximum(1.0 - a_t * a_t, 0.0))          # a*a == exp(2*log_a)
    a_scr[...] = a_t
    b_scr[...] = mult * gate_x * xc

    # ---- sequential linear recurrence h_t = a_t*h_{t-1} + b_t ---------------
    # Chunked: one aligned (Bt, 8, H) load/store pair per iteration, the 8
    # serial updates stay register-resident.  Result overwrites b_scr in place.
    def chunk_body(c, h):
        r0 = pl.multiple_of(c * CHUNK, CHUNK)
        a_blk = a_scr[:, pl.ds(r0, CHUNK), :]                   # (Bt, 8, H)
        b_blk = b_scr[:, pl.ds(r0, CHUNK), :]
        rows = []
        for i in range(CHUNK):                                  # unrolled
            h = a_blk[:, i:i + 1, :] * h + b_blk[:, i:i + 1, :]
            rows.append(h)
        b_scr[:, pl.ds(r0, CHUNK), :] = jnp.concatenate(rows, axis=1)
        return h

    jax.lax.fori_loop(0, S // CHUNK, chunk_body,
                      jnp.zeros((Bt, 1, H), jnp.float32))
    # b_scr now holds the recurrence outputs y_t.

    # ---- gate, project back, residual ----------------------------------------
    gated = (jax.nn.silu(out1) * b_scr[...]).reshape(M, H)
    rg_out = jnp.dot(gated.astype(jnp.bfloat16), wout_blk_ref[...],
                     preferred_element_type=jnp.float32).reshape(Bt, S, D)
    y1 = x + rg_out

    # ---- FFN branch: RMSNorm (gain folded into w13) -> fused SwiGLU ----------
    h2 = _rms_scale(y1)
    f = jnp.dot(h2.reshape(M, D).astype(jnp.bfloat16), w13_ref[...],
                preferred_element_type=jnp.float32)             # (M, 2F)
    g = jax.nn.silu(f[:, :F]) * f[:, F:]
    ff = jnp.dot(g.astype(jnp.bfloat16), w2_ref[...],
                 preferred_element_type=jnp.float32).reshape(Bt, S, D)

    o_ref[...] = y1 + ff


def hawk_block_pallas(x, p, *, block_b=None):
    B, S, D = x.shape
    H = p["wout_blk"].shape[0]
    assert S % CHUNK == 0, "seqlen must be a multiple of 8"

    if block_b is None:
        # Fold batch to fill MXU rows, but keep >=2 grid steps when the batch
        # allows so both v7x TensorCores get work.
        block_b = min(B, max(1, 256 // S))
        while B % block_b:
            block_b -= 1
        if B // block_b < 2 and B >= 2:
            block_b = max(1, block_b // 2)
            while B % block_b:
                block_b -= 1
    assert B % block_b == 0

    # Hoisted / re-laid-out parameters: matmul weights in bf16 (f32 accumulate),
    # RMSNorm gains folded into the following matmuls, conv taps / gate constant
    # stay f32.
    neg_c_asp = (-C_CONST * jnp.log1p(jnp.exp(p["a_raw"]))).astype(jnp.float32)
    win_blk = (p["rms1"].reshape(D, 1) * p["win_blk"]).astype(jnp.bfloat16)
    w13 = jnp.concatenate([p["w1"], p["w3"]], axis=1)
    w13 = (p["rms2"].reshape(D, 1) * w13).astype(jnp.bfloat16)
    weights = [
        win_blk,                                # (D, 2H) rms1-folded
        p["conv_w"].astype(jnp.float32),        # (K, H)
        p["win_rg"].astype(jnp.bfloat16),       # (H, 2H)
        neg_c_asp,                              # (1, H)
        p["wout_blk"].astype(jnp.bfloat16),     # (H, D)
        w13,                                    # (D, 2F) rms2-folded
        p["w2"].astype(jnp.bfloat16),           # (F, D)
    ]

    in_specs = [pl.BlockSpec((block_b, S, D), lambda b: (b, 0, 0))]
    in_specs += [pl.BlockSpec(w.shape, lambda b: (0, 0)) for w in weights]

    return pl.pallas_call(
        hawk_kernel,
        out_shape=jax.ShapeDtypeStruct((B, S, D), jnp.float32),
        grid_spec=pltpu.PrefetchScalarGridSpec(
            num_scalar_prefetch=0,
            grid=(B // block_b,),
            in_specs=in_specs,
            out_specs=pl.BlockSpec((block_b, S, D), lambda b: (b, 0, 0)),
            scratch_shapes=[
                pltpu.VMEM((block_b, S + PAD, H), jnp.float32),  # conv pad
                pltpu.VMEM((block_b, S, H), jnp.float32),        # a_t
                pltpu.VMEM((block_b, S, H), jnp.float32),        # b_t / y_t
            ],
        ),
        compiler_params=pltpu.CompilerParams(
            dimension_semantics=("parallel",)),
    )(x, *weights)


def hawk_reference(x, p):
    """Pure-JAX f32 reference mirroring the PyTorch forward semantics."""
    B, S, D = x.shape
    H = p["wout_blk"].shape[0]
    K = p["conv_w"].shape[0]

    h1 = _rmsnorm(x, p["rms1"])
    z = h1 @ p["win_blk"]
    out1, out2 = z[..., :H], z[..., H:]

    pad = jnp.pad(out2, ((0, 0), (K - 1, 0), (0, 0)))
    xc = sum(p["conv_w"][k][None, None, :] * pad[:, k:k + S, :] for k in range(K))

    zg = xc @ p["win_rg"]
    gate_x = jax.nn.sigmoid(zg[..., :H])
    gate_a = jax.nn.sigmoid(zg[..., H:])
    a_sp = jnp.log1p(jnp.exp(p["a_raw"]))
    log_a = -C_CONST * gate_a * a_sp
    a_t = jnp.exp(log_a)
    b_t = jnp.sqrt(1.0 - jnp.exp(2.0 * log_a)) * gate_x * xc

    def step(h, ab):
        a, b = ab
        h = a * h + b
        return h, h

    _, ys = jax.lax.scan(step, jnp.zeros((B, H), jnp.float32),
                         (jnp.swapaxes(a_t, 0, 1), jnp.swapaxes(b_t, 0, 1)))
    rg = jnp.swapaxes(ys, 0, 1)

    y1 = x + (jax.nn.silu(out1) * rg) @ p["wout_blk"]
    h2 = _rmsnorm(y1, p["rms2"])
    ff = (jax.nn.silu(h2 @ p["w1"]) * (h2 @ p["w3"])) @ p["w2"]
    return y1 + ff


if __name__ == "__main__":
    # Small, TPU-friendly shapes consistent with the module:
    #   emb_dim D=128, hidden_dim H=128, ffn_dim F=256,
    #   nb_heads=4 (head_dim=32), conv_size K=4, batch B=4, seqlen S=32.
    B, S, D, H, Fd = 4, 32, 128, 128, 256
    nb_heads, head_dim, K = 4, 32, 4

    key = jax.random.PRNGKey(0)
    ks = jax.random.split(key, 12)

    # Deterministic synthetic parameters (Linear weights stored as (in, out)).
    # a_raw follows the torch init: a = 0.5 * log(U(0.81, 0.998)), tiled per head.
    a_head = 0.5 * jnp.log(jax.random.uniform(ks[6], (head_dim,),
                                              minval=0.81, maxval=0.998))
    params = {
        "rms1": 1.0 + 0.02 * jax.random.normal(ks[0], (1, D)),
        "rms2": 1.0 + 0.02 * jax.random.normal(ks[1], (1, D)),
        "win_blk": 0.02 * jax.random.normal(ks[2], (D, 2 * H)),
        "wout_blk": 0.02 * jax.random.normal(ks[3], (H, D)),
        "conv_w": 0.5 * jax.random.normal(ks[4], (K, H)),
        "win_rg": 0.02 * jax.random.normal(ks[5], (H, 2 * H)),
        "a_raw": jnp.tile(a_head, nb_heads)[None, :],               # (1, H)
        "w1": 0.02 * jax.random.normal(ks[7], (D, Fd)),
        "w3": 0.02 * jax.random.normal(ks[8], (D, Fd)),
        "w2": 0.02 * jax.random.normal(ks[9], (Fd, D)),
    }
    x = jax.random.normal(ks[10], (B, S, D), jnp.float32)

    out = hawk_block_pallas(x, params)
    jax.block_until_ready(out)

    ref = hawk_reference(x, params)
    max_err = float(jnp.max(jnp.abs(out - ref)))
    # bf16 matmul operands (f32 accumulation) -> looser tolerance than pure f32.
    assert max_err < 1e-2, f"mismatch vs reference: max abs err = {max_err}"

    print("KERNEL_OK")
</pallas_src>

<mosaic_0001>
module attributes {stable_mosaic.version = 11 : i64} {
  func.func @hawk_kernel(%arg0: i32, %arg1: memref<2x32x128xf32, #tpu.memory_space<vmem>>, %arg2: memref<128x256xbf16, #tpu.memory_space<vmem>>, %arg3: memref<4x128xf32, #tpu.memory_space<vmem>>, %arg4: memref<128x256xbf16, #tpu.memory_space<vmem>>, %arg5: memref<1x128xf32, #tpu.memory_space<vmem>>, %arg6: memref<128x128xbf16, #tpu.memory_space<vmem>>, %arg7: memref<128x512xbf16, #tpu.memory_space<vmem>>, %arg8: memref<256x128xbf16, #tpu.memory_space<vmem>>, %arg9: memref<2x32x128xf32, #tpu.memory_space<vmem>>, %arg10: memref<2x40x128xf32, #tpu.memory_space<vmem>>, %arg11: memref<2x32x128xf32, #tpu.memory_space<vmem>>, %arg12: memref<2x32x128xf32, #tpu.memory_space<vmem>>) attributes {dimension_semantics = [#tpu.dimension_semantics<parallel>], iteration_bounds = array<i64: 2>, scalar_prefetch = 0 : i64, scratch_operands = 3 : i64, tpu.core_type = #tpu.core_type<tc>, window_params = [{transform_indices = @transform_0, window_bounds = array<i64: 2, 32, 128>}, {pipeline_mode = #tpu.pipeline_mode<synchronous>, transform_indices = @transform_1, window_bounds = array<i64: 128, 256>}, {pipeline_mode = #tpu.pipeline_mode<synchronous>, transform_indices = @transform_2, window_bounds = array<i64: 4, 128>}, {pipeline_mode = #tpu.pipeline_mode<synchronous>, transform_indices = @transform_3, window_bounds = array<i64: 128, 256>}, {pipeline_mode = #tpu.pipeline_mode<synchronous>, transform_indices = @transform_4, window_bounds = array<i64: 1, 128>}, {pipeline_mode = #tpu.pipeline_mode<synchronous>, transform_indices = @transform_5, window_bounds = array<i64: 128, 128>}, {pipeline_mode = #tpu.pipeline_mode<synchronous>, transform_indices = @transform_6, window_bounds = array<i64: 128, 512>}, {pipeline_mode = #tpu.pipeline_mode<synchronous>, transform_indices = @transform_7, window_bounds = array<i64: 256, 128>}, {transform_indices = @transform_8, window_bounds = array<i64: 2, 32, 128>}]} {
    %c0 = arith.constant 0 : index
    %c0_0 = arith.constant 0 : index
    %c0_1 = arith.constant 0 : index
    %0 = vector.load %arg1[%c0, %c0_0, %c0_1] : memref<2x32x128xf32, #tpu.memory_space<vmem>>, vector<2x32x128xf32>
    %1 = arith.mulf %0, %0 : vector<2x32x128xf32>
    %cst = arith.constant dense<0.000000e+00> : vector<2x32xf32>
    %2 = vector.multi_reduction <add>, %1, %cst [2] : vector<2x32x128xf32> to vector<2x32xf32>
    %3 = vector.shape_cast %2 : vector<2x32xf32> to vector<2x32x1xf32>
    %cst_2 = arith.constant 1.280000e+02 : f32
    %4 = vector.broadcast %cst_2 : f32 to vector<2x32x1xf32>
    %5 = arith.divf %3, %4 : vector<2x32x1xf32>
    %cst_3 = arith.constant 9.99999974E-6 : f32
    %6 = vector.broadcast %cst_3 : f32 to vector<2x32x1xf32>
    %7 = arith.addf %5, %6 : vector<2x32x1xf32>
    %8 = math.rsqrt %7 : vector<2x32x1xf32>
    %9 = vector.broadcast %8 : vector<2x32x1xf32> to vector<2x32x128xf32>
    %10 = arith.mulf %0, %9 : vector<2x32x128xf32>
    %11 = vector.shape_cast %10 : vector<2x32x128xf32> to vector<64x128xf32>
    %12 = arith.truncf %11 : vector<64x128xf32> to vector<64x128xbf16>
    %c0_4 = arith.constant 0 : index
    %c0_5 = arith.constant 0 : index
    %13 = vector.load %arg2[%c0_4, %c0_5] : memref<128x256xbf16, #tpu.memory_space<vmem>>, vector<128x256xbf16>
    %cst_6 = arith.constant dense<0.000000e+00> : vector<64x256xf32>
    %14 = tpu.matmul %12, %13, %cst_6 {dimension_numbers = #tpu.dot_dimension_numbers<[1], [0], [0], [1], [0, 0, 1, 1], [], []>} : vector<64x128xbf16>, vector<128x256xbf16>, vector<64x256xf32> -> vector<64x256xf32>
    %15 = vector.extract_strided_slice %14 {offsets = [0, 0], sizes = [64, 128], strides = [1, 1]} : vector<64x256xf32> to vector<64x128xf32>
    %16 = vector.shape_cast %15 : vector<64x128xf32> to vector<2x32x128xf32>
    %17 = vector.extract_strided_slice %14 {offsets = [0, 128], sizes = [64, 128], strides = [1, 1]} : vector<64x256xf32> to vector<64x128xf32>
    %18 = vector.shape_cast %17 : vector<64x128xf32> to vector<2x32x128xf32>
    %cst_7 = arith.constant 0.000000e+00 : f32
    %19 = vector.broadcast %cst_7 : f32 to vector<2x8x128xf32>
    %c0_8 = arith.constant 0 : index
    %c0_9 = arith.constant 0 : index
    %c0_10 = arith.constant 0 : index
    %20 = vector.load %arg10[%c0_8, %c0_9, %c0_10] : memref<2x40x128xf32, #tpu.memory_space<vmem>>, vector<2x8x128xf32>
    tpu.vector_store %arg10[%c0_8, %c0_9, %c0_10], %19 {strides = array<i32>} : memref<2x40x128xf32, #tpu.memory_space<vmem>>, vector<2x8x128xf32>,
    %c0_11 = arith.constant 0 : index
    %c8 = arith.constant 8 : index
    %c0_12 = arith.constant 0 : index
    %21 = vector.load %arg10[%c0_11, %c8, %c0_12] : memref<2x40x128xf32, #tpu.memory_space<vmem>>, vector<2x32x128xf32>
    tpu.vector_store %arg10[%c0_11, %c8, %c0_12], %18 {strides = array<i32>} : memref<2x40x128xf32, #tpu.memory_space<vmem>>, vector<2x32x128xf32>,
    %cst_13 = arith.constant 0.000000e+00 : f32
    %22 = vector.broadcast %cst_13 : f32 to vector<2x32x128xf32>
    %c3 = arith.constant 3 : index
    %c0_14 = arith.constant 0 : index
    %23 = vector.load %arg3[%c3, %c0_14] : memref<4x128xf32, #tpu.memory_space<vmem>>, vector<1x128xf32>
    %c0_15 = arith.constant 0 : index
    %c8_16 = arith.constant 8 : index
    %c0_17 = arith.constant 0 : index
    %24 = vector.load %arg10[%c0_15, %c8_16, %c0_17] : memref<2x40x128xf32, #tpu.memory_space<vmem>>, vector<2x32x128xf32>
    %25 = vector.shape_cast %23 : vector<1x128xf32> to vector<1x1x128xf32>
    %26 = vector.broadcast %25 : vector<1x1x128xf32> to vector<2x32x128xf32>
    %27 = arith.mulf %26, %24 : vector<2x32x128xf32>
    %28 = arith.addf %22, %27 : vector<2x32x128xf32>
    %c2 = arith.constant 2 : index
    %c0_18 = arith.constant 0 : index
    %29 = vector.load %arg3[%c2, %c0_18] : memref<4x128xf32, #tpu.memory_space<vmem>>, vector<1x128xf32>
    %c0_19 = arith.constant 0 : index
    %c7 = arith.constant 7 : index
    %c0_20 = arith.constant 0 : index
    %30 = vector.load %arg10[%c0_19, %c7, %c0_20] : memref<2x40x128xf32, #tpu.memory_space<vmem>>, vector<2x32x128xf32>
    %31 = vector.shape_cast %29 : vector<1x128xf32> to vector<1x1x128xf32>
    %32 = vector.broadcast %31 : vector<1x1x128xf32> to vector<2x32x128xf32>
    %33 = arith.mulf %32, %30 : vector<2x32x128xf32>
    %34 = arith.addf %28, %33 : vector<2x32x128xf32>
    %c1 = arith.constant 1 : index
    %c0_21 = arith.constant 0 : index
    %35 = vector.load %arg3[%c1, %c0_21] : memref<4x128xf32, #tpu.memory_space<vmem>>, vector<1x128xf32>
    %c0_22 = arith.constant 0 : index
    %c6 = arith.constant 6 : index
    %c0_23 = arith.constant 0 : index
    %36 = vector.load %arg10[%c0_22, %c6, %c0_23] : memref<2x40x128xf32, #tpu.memory_space<vmem>>, vector<2x32x128xf32>
    %37 = vector.shape_cast %35 : vector<1x128xf32> to vector<1x1x128xf32>
    %38 = vector.broadcast %37 : vector<1x1x128xf32> to vector<2x32x128xf32>
    %39 = arith.mulf %38, %36 : vector<2x32x128xf32>
    %40 = arith.addf %34, %39 : vector<2x32x128xf32>
    %c0_24 = arith.constant 0 : index
    %c0_25 = arith.constant 0 : index
    %41 = vector.load %arg3[%c0_24, %c0_25] : memref<4x128xf32, #tpu.memory_space<vmem>>, vector<1x128xf32>
    %c0_26 = arith.constant 0 : index
    %c5 = arith.constant 5 : index
    %c0_27 = arith.constant 0 : index
    %42 = vector.load %arg10[%c0_26, %c5, %c0_27] : memref<2x40x128xf32, #tpu.memory_space<vmem>>, vector<2x32x128xf32>
    %43 = vector.shape_cast %41 : vector<1x128xf32> to vector<1x1x128xf32>
    %44 = vector.broadcast %43 : vector<1x1x128xf32> to vector<2x32x128xf32>
    %45 = arith.mulf %44, %42 : vector<2x32x128xf32>
    %46 = arith.addf %40, %45 : vector<2x32x128xf32>
    %47 = vector.shape_cast %46 : vector<2x32x128xf32> to vector<64x128xf32>
    %48 = arith.truncf %47 : vector<64x128xf32> to vector<64x128xbf16>
    %c0_28 = arith.constant 0 : index
    %c0_29 = arith.constant 0 : index
    %49 = vector.load %arg4[%c0_28, %c0_29] : memref<128x256xbf16, #tpu.memory_space<vmem>>, vector<128x256xbf16>
    %cst_30 = arith.constant dense<0.000000e+00> : vector<64x256xf32>
    %50 = tpu.matmul %48, %49, %cst_30 {dimension_numbers = #tpu.dot_dimension_numbers<[1], [0], [0], [1], [0, 0, 1, 1], [], []>} : vector<64x128xbf16>, vector<128x256xbf16>, vector<64x256xf32> -> vector<64x256xf32>
    %51 = vector.extract_strided_slice %50 {offsets = [0, 0], sizes = [64, 128], strides = [1, 1]} : vector<64x256xf32> to vector<64x128xf32>
    %52 = arith.negf %51 : vector<64x128xf32>
    %53 = math.exp %52 : vector<64x128xf32>
    %cst_31 = arith.constant 1.000000e+00 : f32
    %54 = vector.broadcast %cst_31 : f32 to vector<64x128xf32>
    %55 = arith.addf %54, %53 : vector<64x128xf32>
    %56 = arith.divf %54, %55 : vector<64x128xf32>
    %57 = vector.shape_cast %56 : vector<64x128xf32> to vector<2x32x128xf32>
    %58 = vector.extract_strided_slice %50 {offsets = [0, 128], sizes = [64, 128], strides = [1, 1]} : vector<64x256xf32> to vector<64x128xf32>
    %59 = arith.negf %58 : vector<64x128xf32>
    %60 = math.exp %59 : vector<64x128xf32>
    %cst_32 = arith.constant 1.000000e+00 : f32
    %61 = vector.broadcast %cst_32 : f32 to vector<64x128xf32>
    %62 = arith.addf %61, %60 : vector<64x128xf32>
    %63 = arith.divf %61, %62 : vector<64x128xf32>
    %64 = vector.shape_cast %63 : vector<64x128xf32> to vector<2x32x128xf32>
    %c0_33 = arith.constant 0 : index
    %c0_34 = arith.constant 0 : index
    %65 = vector.load %arg5[%c0_33, %c0_34] : memref<1x128xf32, #tpu.memory_space<vmem>>, vector<1x128xf32>
    %66 = vector.shape_cast %65 : vector<1x128xf32> to vector<1x1x128xf32>
    %67 = vector.broadcast %66 : vector<1x1x128xf32> to vector<2x32x128xf32>
    %68 = arith.mulf %67, %64 : vector<2x32x128xf32>
    %69 = math.exp %68 : vector<2x32x128xf32>
    %70 = arith.mulf %69, %69 : vector<2x32x128xf32>
    %cst_35 = arith.constant 1.000000e+00 : f32
    %71 = vector.broadcast %cst_35 : f32 to vector<2x32x128xf32>
    %72 = arith.subf %71, %70 : vector<2x32x128xf32>
    %cst_36 = arith.constant 0.000000e+00 : f32
    %73 = vector.broadcast %cst_36 : f32 to vector<2x32x128xf32>
    %74 = arith.maximumf %72, %73 : vector<2x32x128xf32>
    %75 = math.sqrt %74 : vector<2x32x128xf32>
    %c0_37 = arith.constant 0 : index
    %c0_38 = arith.constant 0 : index
    %c0_39 = arith.constant 0 : index
    %76 = vector.load %arg11[%c0_37, %c0_38, %c0_39] : memref<2x32x128xf32, #tpu.memory_space<vmem>>, vector<2x32x128xf32>
    tpu.vector_store %arg11[%c0_37, %c0_38, %c0_39], %69 {strides = array<i32>} : memref<2x32x128xf32, #tpu.memory_space<vmem>>, vector<2x32x128xf32>,
    %77 = arith.mulf %75, %57 : vector<2x32x128xf32>
    %78 = arith.mulf %77, %46 : vector<2x32x128xf32>
    %c0_40 = arith.constant 0 : index
    %c0_41 = arith.constant 0 : index
    %c0_42 = arith.constant 0 : index
    %79 = vector.load %arg12[%c0_40, %c0_41, %c0_42] : memref<2x32x128xf32, #tpu.memory_space<vmem>>, vector<2x32x128xf32>
    tpu.vector_store %arg12[%c0_40, %c0_41, %c0_42], %78 {strides = array<i32>} : memref<2x32x128xf32, #tpu.memory_space<vmem>>, vector<2x32x128xf32>,
    %cst_43 = arith.constant 0.000000e+00 : f32
    %80 = vector.broadcast %cst_43 : f32 to vector<2x1x128xf32>
    %c0_i32 = arith.constant 0 : i32
    %c4_i32 = arith.constant 4 : i32
    %81 = arith.addi %c0_i32, %c4_i32 : i32
    %c1_i32 = arith.constant 1 : i32
    %82 = scf.for %arg13 = %c0_i32 to %81 step %c1_i32 iter_args(%arg14 = %80) -> (vector<2x1x128xf32>)  : i32 {
      %c8_i32 = arith.constant 8 : i32
      %126 = arith.muli %arg13, %c8_i32 : i32
      %127 = tpu.assume_multiple %126, 8 : i32
      %c0_65 = arith.constant 0 : index
      %128 = arith.index_cast %127 : i32 to index
      %c0_66 = arith.constant 0 : index
      %129 = vector.load %arg11[%c0_65, %128, %c0_66] : memref<2x32x128xf32, #tpu.memory_space<vmem>>, vector<2x8x128xf32>
      %c0_67 = arith.constant 0 : index
      %130 = arith.index_cast %127 : i32 to index
      %c0_68 = arith.constant 0 : index
      %131 = vector.load %arg12[%c0_67, %130, %c0_68] : memref<2x32x128xf32, #tpu.memory_space<vmem>>, vector<2x8x128xf32>
      %132 = vector.extract_strided_slice %129 {offsets = [0, 0, 0], sizes = [2, 1, 128], strides = [1, 1, 1]} : vector<2x8x128xf32> to vector<2x1x128xf32>
      %133 = arith.mulf %132, %arg14 : vector<2x1x128xf32>
      %134 = vector.extract_strided_slice %131 {offsets = [0, 0, 0], sizes = [2, 1, 128], strides = [1, 1, 1]} : vector<2x8x128xf32> to vector<2x1x128xf32>
      %135 = arith.addf %133, %134 : vector<2x1x128xf32>
      %136 = vector.extract_strided_slice %129 {offsets = [0, 1, 0], sizes = [2, 1, 128], strides = [1, 1, 1]} : vector<2x8x128xf32> to vector<2x1x128xf32>
      %137 = arith.mulf %136, %135 : vector<2x1x128xf32>
      %138 = vector.extract_strided_slice %131 {offsets = [0, 1, 0], sizes = [2, 1, 128], strides = [1, 1, 1]} : vector<2x8x128xf32> to vector<2x1x128xf32>
      %139 = arith.addf %137, %138 : vector<2x1x128xf32>
      %140 = vector.extract_strided_slice %129 {offsets = [0, 2, 0], sizes = [2, 1, 128], strides = [1, 1, 1]} : vector<2x8x128xf32> to vector<2x1x128xf32>
      %141 = arith.mulf %140, %139 : vector<2x1x128xf32>
      %142 = vector.extract_strided_slice %131 {offsets = [0, 2, 0], sizes = [2, 1, 128], strides = [1, 1, 1]} : vector<2x8x128xf32> to vector<2x1x128xf32>
      %143 = arith.addf %141, %142 : vector<2x1x128xf32>
      %144 = vector.extract_strided_slice %129 {offsets = [0, 3, 0], sizes = [2, 1, 128], strides = [1, 1, 1]} : vector<2x8x128xf32> to vector<2x1x128xf32>
      %145 = arith.mulf %144, %143 : vector<2x1x128xf32>
      %146 = vector.extract_strided_slice %131 {offsets = [0, 3, 0], sizes = [2, 1, 128], strides = [1, 1, 1]} : vector<2x8x128xf32> to vector<2x1x128xf32>
      %147 = arith.addf %145, %146 : vector<2x1x128xf32>
      %148 = vector.extract_strided_slice %129 {offsets = [0, 4, 0], sizes = [2, 1, 128], strides = [1, 1, 1]} : vector<2x8x128xf32> to vector<2x1x128xf32>
      %149 = arith.mulf %148, %147 : vector<2x1x128xf32>
      %150 = vector.extract_strided_slice %131 {offsets = [0, 4, 0], sizes = [2, 1, 128], strides = [1, 1, 1]} : vector<2x8x128xf32> to vector<2x1x128xf32>
      %151 = arith.addf %149, %150 : vector<2x1x128xf32>
      %152 = vector.extract_strided_slice %129 {offsets = [0, 5, 0], sizes = [2, 1, 128], strides = [1, 1, 1]} : vector<2x8x128xf32> to vector<2x1x128xf32>
      %153 = arith.mulf %152, %151 : vector<2x1x128xf32>
      %154 = vector.extract_strided_slice %131 {offsets = [0, 5, 0], sizes = [2, 1, 128], strides = [1, 1, 1]} : vector<2x8x128xf32> to vector<2x1x128xf32>
      %155 = arith.addf %153, %154 : vector<2x1x128xf32>
      %156 = vector.extract_strided_slice %129 {offsets = [0, 6, 0], sizes = [2, 1, 128], strides = [1, 1, 1]} : vector<2x8x128xf32> to vector<2x1x128xf32>
      %157 = arith.mulf %156, %155 : vector<2x1x128xf32>
      %158 = vector.extract_strided_slice %131 {offsets = [0, 6, 0], sizes = [2, 1, 128], strides = [1, 1, 1]} : vector<2x8x128xf32> to vector<2x1x128xf32>
      %159 = arith.addf %157, %158 : vector<2x1x128xf32>
      %160 = vector.extract_strided_slice %129 {offsets = [0, 7, 0], sizes = [2, 1, 128], strides = [1, 1, 1]} : vector<2x8x128xf32> to vector<2x1x128xf32>
      %161 = arith.mulf %160, %159 : vector<2x1x128xf32>
      %162 = vector.extract_strided_slice %131 {offsets = [0, 7, 0], sizes = [2, 1, 128], strides = [1, 1, 1]} : vector<2x8x128xf32> to vector<2x1x128xf32>
      %163 = arith.addf %161, %162 : vector<2x1x128xf32>
      %164 = tpu.concatenate %135, %139, %143, %147, %151, %155, %159, %163 in 1 : vector<2x1x128xf32>, vector<2x1x128xf32>, vector<2x1x128xf32>, vector<2x1x128xf32>, vector<2x1x128xf32>, vector<2x1x128xf32>, vector<2x1x128xf32>, vector<2x1x128xf32> -> vector<2x8x128xf32>
      %c0_69 = arith.constant 0 : index
      %165 = arith.index_cast %127 : i32 to index
      %c0_70 = arith.constant 0 : index
      %166 = vector.load %arg12[%c0_69, %165, %c0_70] : memref<2x32x128xf32, #tpu.memory_space<vmem>>, vector<2x8x128xf32>
      tpu.vector_store %arg12[%c0_69, %165, %c0_70], %164 {strides = array<i32>} : memref<2x32x128xf32, #tpu.memory_space<vmem>>, vector<2x8x128xf32>,
      scf.yield %163 : vector<2x1x128xf32>
    }
    %c4_i32_44 = arith.constant 4 : i32
    %83 = arith.negf %16 : vector<2x32x128xf32>
    %84 = math.exp %83 : vector<2x32x128xf32>
    %cst_45 = arith.constant 1.000000e+00 : f32
    %85 = vector.broadcast %cst_45 : f32 to vector<2x32x128xf32>
    %86 = arith.addf %85, %84 : vector<2x32x128xf32>
    %87 = arith.divf %85, %86 : vector<2x32x128xf32>
    %88 = arith.mulf %16, %87 : vector<2x32x128xf32>
    %c0_46 = arith.constant 0 : index
    %c0_47 = arith.constant 0 : index
    %c0_48 = arith.constant 0 : index
    %89 = vector.load %arg12[%c0_46, %c0_47, %c0_48] : memref<2x32x128xf32, #tpu.memory_space<vmem>>, vector<2x32x128xf32>
    %90 = arith.mulf %88, %89 : vector<2x32x128xf32>
    %91 = vector.shape_cast %90 : vector<2x32x128xf32> to vector<64x128xf32>
    %92 = arith.truncf %91 : vector<64x128xf32> to vector<64x128xbf16>
    %c0_49 = arith.constant 0 : index
    %c0_50 = arith.constant 0 : index
    %93 = vector.load %arg6[%c0_49, %c0_50] : memref<128x128xbf16, #tpu.memory_space<vmem>>, vector<128x128xbf16>
    %cst_51 = arith.constant dense<0.000000e+00> : vector<64x128xf32>
    %94 = tpu.matmul %92, %93, %cst_51 {dimension_numbers = #tpu.dot_dimension_numbers<[1], [0], [0], [1], [0, 0, 1, 1], [], []>} : vector<64x128xbf16>, vector<128x128xbf16>, vector<64x128xf32> -> vector<64x128xf32>
    %95 = vector.shape_cast %94 : vector<64x128xf32> to vector<2x32x128xf32>
    %96 = arith.addf %0, %95 : vector<2x32x128xf32>
    %97 = arith.mulf %96, %96 : vector<2x32x128xf32>
    %cst_52 = arith.constant dense<0.000000e+00> : vector<2x32xf32>
    %98 = vector.multi_reduction <add>, %97, %cst_52 [2] : vector<2x32x128xf32> to vector<2x32xf32>
    %99 = vector.shape_cast %98 : vector<2x32xf32> to vector<2x32x1xf32>
    %cst_53 = arith.constant 1.280000e+02 : f32
    %100 = vector.broadcast %cst_53 : f32 to vector<2x32x1xf32>
    %101 = arith.divf %99, %100 : vector<2x32x1xf32>
    %cst_54 = arith.constant 9.99999974E-6 : f32
    %102 = vector.broadcast %cst_54 : f32 to vector<2x32x1xf32>
    %103 = arith.addf %101, %102 : vector<2x32x1xf32>
    %104 = math.rsqrt %103 : vector<2x32x1xf32>
    %105 = vector.broadcast %104 : vector<2x32x1xf32> to vector<2x32x128xf32>
    %106 = arith.mulf %96, %105 : vector<2x32x128xf32>
    %107 = vector.shape_cast %106 : vector<2x32x128xf32> to vector<64x128xf32>
    %108 = arith.truncf %107 : vector<64x128xf32> to vector<64x128xbf16>
    %c0_55 = arith.constant 0 : index
    %c0_56 = arith.constant 0 : index
    %109 = vector.load %arg7[%c0_55, %c0_56] : memref<128x512xbf16, #tpu.memory_space<vmem>>, vector<128x512xbf16>
    %cst_57 = arith.constant dense<0.000000e+00> : vector<64x512xf32>
    %110 = tpu.matmul %108, %109, %cst_57 {dimension_numbers = #tpu.dot_dimension_numbers<[1], [0], [0], [1], [0, 0, 1, 1], [], []>} : vector<64x128xbf16>, vector<128x512xbf16>, vector<64x512xf32> -> vector<64x512xf32>
    %111 = vector.extract_strided_slice %110 {offsets = [0, 0], sizes = [64, 256], strides = [1, 1]} : vector<64x512xf32> to vector<64x256xf32>
    %112 = arith.negf %111 : vector<64x256xf32>
    %113 = math.exp %112 : vector<64x256xf32>
    %cst_58 = arith.constant 1.000000e+00 : f32
    %114 = vector.broadcast %cst_58 : f32 to vector<64x256xf32>
    %115 = arith.addf %114, %113 : vector<64x256xf32>
    %116 = arith.divf %114, %115 : vector<64x256xf32>
    %117 = arith.mulf %111, %116 : vector<64x256xf32>
    %118 = vector.extract_strided_slice %110 {offsets = [0, 256], sizes = [64, 256], strides = [1, 1]} : vector<64x512xf32> to vector<64x256xf32>
    %119 = arith.mulf %117, %118 : vector<64x256xf32>
    %120 = arith.truncf %119 : vector<64x256xf32> to vector<64x256xbf16>
    %c0_59 = arith.constant 0 : index
    %c0_60 = arith.constant 0 : index
    %121 = vector.load %arg8[%c0_59, %c0_60] : memref<256x128xbf16, #tpu.memory_space<vmem>>, vector<256x128xbf16>
    %cst_61 = arith.constant dense<0.000000e+00> : vector<64x128xf32>
    %122 = tpu.matmul %120, %121, %cst_61 {dimension_numbers = #tpu.dot_dimension_numbers<[1], [0], [0], [1], [0, 0, 1, 1], [], []>} : vector<64x256xbf16>, vector<256x128xbf16>, vector<64x128xf32> -> vector<64x128xf32>
    %123 = vector.shape_cast %122 : vector<64x128xf32> to vector<2x32x128xf32>
    %124 = arith.addf %96, %123 : vector<2x32x128xf32>
    %c0_62 = arith.constant 0 : index
    %c0_63 = arith.constant 0 : index
    %c0_64 = arith.constant 0 : index
    %125 = vector.load %arg9[%c0_62, %c0_63, %c0_64] : memref<2x32x128xf32, #tpu.memory_space<vmem>>, vector<2x32x128xf32>
    tpu.vector_store %arg9[%c0_62, %c0_63, %c0_64], %124 {strides = array<i32>} : memref<2x32x128xf32, #tpu.memory_space<vmem>>, vector<2x32x128xf32>,
    return
  }
  func.func @transform_0(%arg0: i32) -> (i32, i32, i32) {
    %c0_i32 = arith.constant 0 : i32
    %c0_i32_0 = arith.constant 0 : i32
    %c0_i32_1 = arith.constant 0 : i32
    return %arg0, %c0_i32, %c0_i32_0 : i32, i32, i32
  }
  func.func @transform_1(%arg0: i32) -> (i32, i32) {
    %c0_i32 = arith.constant 0 : i32
    %c0_i32_0 = arith.constant 0 : i32
    %c0_i32_1 = arith.constant 0 : i32
    return %c0_i32, %c0_i32_0 : i32, i32
  }
  func.func @transform_2(%arg0: i32) -> (i32, i32) {
    %c0_i32 = arith.constant 0 : i32
    %c0_i32_0 = arith.constant 0 : i32
    %c0_i32_1 = arith.constant 0 : i32
    return %c0_i32, %c0_i32_0 : i32, i32
  }
  func.func @transform_3(%arg0: i32) -> (i32, i32) {
    %c0_i32 = arith.constant 0 : i32
    %c0_i32_0 = arith.constant 0 : i32
    %c0_i32_1 = arith.constant 0 : i32
    return %c0_i32, %c0_i32_0 : i32, i32
  }
  func.func @transform_4(%arg0: i32) -> (i32, i32) {
    %c0_i32 = arith.constant 0 : i32
    %c0_i32_0 = arith.constant 0 : i32
    %c0_i32_1 = arith.constant 0 : i32
    return %c0_i32, %c0_i32_0 : i32, i32
  }
  func.func @transform_5(%arg0: i32) -> (i32, i32) {
    %c0_i32 = arith.constant 0 : i32
    %c0_i32_0 = arith.constant 0 : i32
    %c0_i32_1 = arith.constant 0 : i32
    return %c0_i32, %c0_i32_0 : i32, i32
  }
  func.func @transform_6(%arg0: i32) -> (i32, i32) {
    %c0_i32 = arith.constant 0 : i32
    %c0_i32_0 = arith.constant 0 : i32
    %c0_i32_1 = arith.constant 0 : i32
    return %c0_i32, %c0_i32_0 : i32, i32
  }
  func.func @transform_7(%arg0: i32) -> (i32, i32) {
    %c0_i32 = arith.constant 0 : i32
    %c0_i32_0 = arith.constant 0 : i32
    %c0_i32_1 = arith.constant 0 : i32
    return %c0_i32, %c0_i32_0 : i32, i32
  }
  func.func @transform_8(%arg0: i32) -> (i32, i32, i32) {
    %c0_i32 = arith.constant 0 : i32
    %c0_i32_0 = arith.constant 0 : i32
    %c0_i32_1 = arith.constant 0 : i32
    return %arg0, %c0_i32, %c0_i32_0 : i32, i32, i32
  }
}

</mosaic_0001>

<llo_original>
// kernel: tpu_custom_call.1
$region0: #{tpu_custom_call.1}
  #allocation0 [shape = 'u32[]', space=smem, size = 0x4, offset = 0x4, fixed_abs, tag = 'smem constant byte address 0x4 - core index']
  #allocation1 [shape = 'u32[144,128]{1,0:T(1,128)}', space=vmem, size = 0x12000, scoped, tag = 'internal scratch']
  #allocation2 [shape = 'f32[2,40,128]{2,1,0:T(8,128)}', space=vmem, size = 0xa000, scoped, tag = 'scratch operand']
  #allocation3 [shape = 'f32[2,32,128]{2,1,0:T(8,128)}', space=vmem, size = 0x8000, scoped, tag = 'scratch operand']
  #allocation4 [shape = 'f32[2,32,128]{2,1,0:T(8,128)}', space=vmem, size = 0x8000, scoped, tag = 'scratch operand']
  %s0 = inlined_call_operand.hbm [shape: f32[4,32,128], index: 0, kind: input, shape index: {}]
  %s1 = inlined_call_operand.hbm [shape: bf16[128,256], index: 1, kind: input, shape index: {}]
  %s2 = inlined_call_operand.hbm [shape: f32[4,128], index: 2, kind: input, shape index: {}]
  %s3 = inlined_call_operand.hbm [shape: bf16[128,256], index: 3, kind: input, shape index: {}]
  %s4 = inlined_call_operand.vmem [shape: f32[1,128], index: 4, kind: input, shape index: {}]
  %s5 = inlined_call_operand.hbm [shape: bf16[128,128], index: 5, kind: input, shape index: {}]
  %s6 = inlined_call_operand.hbm [shape: bf16[128,512], index: 6, kind: input, shape index: {}]
  %s7 = inlined_call_operand.hbm [shape: bf16[256,128], index: 7, kind: input, shape index: {}]
  %s8 = inlined_call_operand.hbm [shape: f32[4,32,128], index: 8, kind: output, shape index: {}]
  %s9 = sld [smem:[#allocation0]]
  $region100: #{tpu_custom_call.1} parent=0
    _
  %s11 = ssub.s32 1, %s9
  %s12 = scalar_select 0, %s11, %s9
  $region1: #{tpu_custom_call.1} parent=0
    #allocation5 [shape = 'u8[65536]{0}', space=vmem, size = 0x10000, scoped, tag = 'input window, operand 0']
    #allocation6 [shape = 's32[2]{0}', space=sflag, size = 0x8, scoped, tag = 'scoped memory for tpu_custom_call.1']
    #allocation7 [shape = 's32[2]{0}', space=sflag, size = 0x8, scoped, tag = 'scoped memory for tpu_custom_call.1']
    #allocation8 [shape = 'u8[65536]{0}', space=vmem, size = 0x10000, scoped, tag = 'input window, operand 1, single buffered']
    #allocation9 [shape = 's32[1]{0}', space=sflag, size = 0x4, scoped, tag = 'scoped memory for tpu_custom_call.1']
    #allocation10 [shape = 'u8[2048]{0}', space=vmem, size = 0x800, scoped, tag = 'input window, operand 2, single buffered']
    #allocation11 [shape = 'u8[65536]{0}', space=vmem, size = 0x10000, scoped, tag = 'input window, operand 3, single buffered']
    #allocation12 [shape = 's32[1]{0}', space=sflag, size = 0x4, scoped, tag = 'scoped memory for tpu_custom_call.1']
    #allocation13 [shape = 'u8[32768]{0}', space=vmem, size = 0x8000, scoped, tag = 'input window, operand 5, single buffered']
    #allocation14 [shape = 'u8[131072]{0}', space=vmem, size = 0x20000, scoped, tag = 'input window, operand 6, single buffered']
    #allocation15 [shape = 's32[1]{0}', space=sflag, size = 0x4, scoped, tag = 'scoped memory for tpu_custom_call.1']
    #allocation16 [shape = 'u8[65536]{0}', space=vmem, size = 0x10000, scoped, tag = 'input window, operand 7, single buffered']
    #allocation17 [shape = 'u8[65536]{0}', space=vmem, size = 0x10000, scoped, tag = 'output window, operand 0']
    %13 = vsyncpa [#allocation6], 0
    %s14 = scalar_lea.sflag [#allocation6], 1
    %15 = vsyncpa %s14, 0
    %16 = vsyncpa [#allocation9], 0
    %17 = vsyncpa [#allocation12], 0
    %18 = vsyncpa [#allocation15], 0
    %19 = vsyncpa [#allocation7], 0
    %s20 = scalar_lea.sflag [#allocation7], 1
    %21 = vsyncpa %s20, 0
    loop: start=0, step=1, limit=4
    $region2: #{tpu_custom_call.1} parent=1 // loop_pre_header
      _
    $region3: #{tpu_custom_call.1} parent=1 // loop_header
      %s23 = sphi 0, %s27
      %p24 = scmp.ge.s32.totalorder %s23, 4
      %s33 = sphi 0, %s35
      %s36 = sphi 0, %s33
      %s37 = sphi 0, %s36
      %s53 = sphi 0, %s37
      %s57 = sphi 0, %s57
      %s59 = sphi 0, %s57
      %s60 = sphi 0, %s59
      %s74 = sphi 0, %s60
      %s78 = sphi 0, %s78
      %s80 = sphi 0, %s78
      %s81 = sphi 0, %s80
      %s95 = sphi 0, %s81
      %s99 = sphi 0, %s99
      %s101 = sphi 0, %s99
      %s102 = sphi 0, %s101
      %s116 = sphi 0, %s102
      %s120 = sphi 0, %s120
      %s122 = sphi 0, %s120
      %s123 = sphi 0, %s122
      %s137 = sphi 0, %s123
      %s141 = sphi 0, %s141
      %s143 = sphi 0, %s141
      %s144 = sphi 0, %s143
      %s158 = sphi 0, %s144
      %s162 = sphi 0, %s162
      %s164 = sphi 0, %s162
      %s165 = sphi 0, %s164
      %s179 = sphi 0, %s165
      %s183 = sphi 0, %s183
      %s185 = sphi 0, %s183
      %s186 = sphi 0, %s185
      %s200 = sphi 0, %s186
      %s206 = sphi 0, %s208
      %s209 = sphi 0, %s206
      %s210 = sphi 0, %s209
      %s226 = sphi 0, %s210
    $region4: #{tpu_custom_call.1} parent=1 // loop_header_branch
      %26 = sbr.rel (%p24) target = $region8
    $region5: #{tpu_custom_call.1} parent=1 // loop_body
      %s28 = ssub.s32 %s23, 1
      %s29 = ssub.s32 %s23, 2
      %s30 = sadd.s32 %s23, 1
      %s31 = ssub.s32 %s23, %s30
      %p32 = scmp.eq.s32.totalorder %s31, 0
      %s34 = sadd.s32 %s33, 1
      %s35 = scalar_select %p32, %s33, %s34
      %p38 = pneg %p32
      %p39 = scmp.eq.s32.totalorder %s23, 1
      %p40 = por %p38, %p39
      %p41 = scmp.ne.s32.totalorder %s33, %s36
      %p42 = scmp.eq.s32.totalorder %s23, 0
      %p43 = por %p41, %p42
      %p44 = scmp.ne.s32.totalorder %s33, %s36
      %p45 = scmp.eq.s32.totalorder %s28, 1
      %p46 = por %p44, %p45
      %p47 = scmp.ne.s32.totalorder %s36, %s37
      %p48 = scmp.eq.s32.totalorder %s28, 0
      %p49 = por %p47, %p48
      %p50 = scmp.ne.s32.totalorder %s36, %s37
      %p51 = scmp.eq.s32.totalorder %s29, 1
      %p52 = por %p50, %p51
      %p54 = scmp.ne.s32.totalorder %s37, %s53
      %p55 = scmp.eq.s32.totalorder %s29, 0
      %p56 = por %p54, %p55
      %s58 = sadd.s32 %s57, 1
      %p61 = scmp.eq.s32.totalorder %s23, 1
      %p62 = scmp.ne.s32.totalorder %s57, %s59
      %p63 = scmp.eq.s32.totalorder %s23, 0
      %p64 = por %p62, %p63
      %p65 = scmp.ne.s32.totalorder %s57, %s59
      %p66 = scmp.eq.s32.totalorder %s28, 1
      %p67 = por %p65, %p66
      %p68 = scmp.ne.s32.totalorder %s59, %s60
      %p69 = scmp.eq.s32.totalorder %s28, 0
      %p70 = por %p68, %p69
      %p71 = scmp.ne.s32.totalorder %s59, %s60
      %p72 = scmp.eq.s32.totalorder %s29, 1
      %p73 = por %p71, %p72
      %p75 = scmp.ne.s32.totalorder %s60, %s74
      %p76 = scmp.eq.s32.totalorder %s29, 0
      %p77 = por %p75, %p76
      %s79 = sadd.s32 %s78, 1
      %p82 = scmp.eq.s32.totalorder %s23, 1
      %p83 = scmp.ne.s32.totalorder %s78, %s80
      %p84 = scmp.eq.s32.totalorder %s23, 0
      %p85 = por %p83, %p84
      %p86 = scmp.ne.s32.totalorder %s78, %s80
      %p87 = scmp.eq.s32.totalorder %s28, 1
      %p88 = por %p86, %p87
      %p89 = scmp.ne.s32.totalorder %s80, %s81
      %p90 = scmp.eq.s32.totalorder %s28, 0
      %p91 = por %p89, %p90
      %p92 = scmp.ne.s32.totalorder %s80, %s81
      %p93 = scmp.eq.s32.totalorder %s29, 1
      %p94 = por %p92, %p93
      %p96 = scmp.ne.s32.totalorder %s81, %s95
      %p97 = scmp.eq.s32.totalorder %s29, 0
      %p98 = por %p96, %p97
      %s100 = sadd.s32 %s99, 1
      %p103 = scmp.eq.s32.totalorder %s23, 1
      %p104 = scmp.ne.s32.totalorder %s99, %s101
      %p105 = scmp.eq.s32.totalorder %s23, 0
      %p106 = por %p104, %p105
      %p107 = scmp.ne.s32.totalorder %s99, %s101
      %p108 = scmp.eq.s32.totalorder %s28, 1
      %p109 = por %p107, %p108
      %p110 = scmp.ne.s32.totalorder %s101, %s102
      %p111 = scmp.eq.s32.totalorder %s28, 0
      %p112 = por %p110, %p111
      %p113 = scmp.ne.s32.totalorder %s101, %s102
      %p114 = scmp.eq.s32.totalorder %s29, 1
      %p115 = por %p113, %p114
      %p117 = scmp.ne.s32.totalorder %s102, %s116
      %p118 = scmp.eq.s32.totalorder %s29, 0
      %p119 = por %p117, %p118
      %s121 = sadd.s32 %s120, 1
      %p124 = scmp.eq.s32.totalorder %s23, 1
      %p125 = scmp.ne.s32.totalorder %s120, %s122
      %p126 = scmp.eq.s32.totalorder %s23, 0
      %p127 = por %p125, %p126
      %p128 = scmp.ne.s32.totalorder %s120, %s122
      %p129 = scmp.eq.s32.totalorder %s28, 1
      %p130 = por %p128, %p129
      %p131 = scmp.ne.s32.totalorder %s122, %s123
      %p132 = scmp.eq.s32.totalorder %s28, 0
      %p133 = por %p131, %p132
      %p134 = scmp.ne.s32.totalorder %s122, %s123
      %p135 = scmp.eq.s32.totalorder %s29, 1
      %p136 = por %p134, %p135
      %p138 = scmp.ne.s32.totalorder %s123, %s137
      %p139 = scmp.eq.s32.totalorder %s29, 0
      %p140 = por %p138, %p139
      %s142 = sadd.s32 %s141, 1
      %p145 = scmp.eq.s32.totalorder %s23, 1
      %p146 = scmp.ne.s32.totalorder %s141, %s143
      %p147 = scmp.eq.s32.totalorder %s23, 0
      %p148 = por %p146, %p147
      %p149 = scmp.ne.s32.totalorder %s141, %s143
      %p150 = scmp.eq.s32.totalorder %s28, 1
      %p151 = por %p149, %p150
      %p152 = scmp.ne.s32.totalorder %s143, %s144
      %p153 = scmp.eq.s32.totalorder %s28, 0
      %p154 = por %p152, %p153
      %p155 = scmp.ne.s32.totalorder %s143, %s144
      %p156 = scmp.eq.s32.totalorder %s29, 1
      %p157 = por %p155, %p156
      %p159 = scmp.ne.s32.totalorder %s144, %s158
      %p160 = scmp.eq.s32.totalorder %s29, 0
      %p161 = por %p159, %p160
      %s163 = sadd.s32 %s162, 1
      %p166 = scmp.eq.s32.totalorder %s23, 1
      %p167 = scmp.ne.s32.totalorder %s162, %s164
      %p168 = scmp.eq.s32.totalorder %s23, 0
      %p169 = por %p167, %p168
      %p170 = scmp.ne.s32.totalorder %s162, %s164
      %p171 = scmp.eq.s32.totalorder %s28, 1
      %p172 = por %p170, %p171
      %p173 = scmp.ne.s32.totalorder %s164, %s165
      %p174 = scmp.eq.s32.totalorder %s28, 0
      %p175 = por %p173, %p174
      %p176 = scmp.ne.s32.totalorder %s164, %s165
      %p177 = scmp.eq.s32.totalorder %s29, 1
      %p178 = por %p176, %p177
      %p180 = scmp.ne.s32.totalorder %s165, %s179
      %p181 = scmp.eq.s32.totalorder %s29, 0
      %p182 = por %p180, %p181
      %s184 = sadd.s32 %s183, 1
      %p187 = scmp.eq.s32.totalorder %s23, 1
      %p188 = scmp.ne.s32.totalorder %s183, %s185
      %p189 = scmp.eq.s32.totalorder %s23, 0
      %p190 = por %p188, %p189
      %p191 = scmp.ne.s32.totalorder %s183, %s185
      %p192 = scmp.eq.s32.totalorder %s28, 1
      %p193 = por %p191, %p192
      %p194 = scmp.ne.s32.totalorder %s185, %s186
      %p195 = scmp.eq.s32.totalorder %s28, 0
      %p196 = por %p194, %p195
      %p197 = scmp.ne.s32.totalorder %s185, %s186
      %p198 = scmp.eq.s32.totalorder %s29, 1
      %p199 = por %p197, %p198
      %p201 = scmp.ne.s32.totalorder %s186, %s200
      %p202 = scmp.eq.s32.totalorder %s29, 0
      %p203 = por %p201, %p202
      %s204 = ssub.s32 %s23, %s30
      %p205 = scmp.eq.s32.totalorder %s204, 0
      %s207 = sadd.s32 %s206, 1
      %s208 = scalar_select %p205, %s206, %s207
      %p211 = pneg %p205
      %p212 = scmp.eq.s32.totalorder %s23, 1
      %p213 = por %p211, %p212
      %p214 = scmp.ne.s32.totalorder %s206, %s209
      %p215 = scmp.eq.s32.totalorder %s23, 0
      %p216 = por %p214, %p215
      %p217 = scmp.ne.s32.totalorder %s206, %s209
      %p218 = scmp.eq.s32.totalorder %s28, 1
      %p219 = por %p217, %p218
      %p220 = scmp.ne.s32.totalorder %s209, %s210
      %p221 = scmp.eq.s32.totalorder %s28, 0
      %p222 = por %p220, %p221
      %p223 = scmp.ne.s32.totalorder %s209, %s210
      %p224 = scmp.eq.s32.totalorder %s29, 1
      %p225 = por %p223, %p224
      %p227 = scmp.ne.s32.totalorder %s210, %s226
      %p228 = scmp.eq.s32.totalorder %s29, 0
      %p229 = por %p227, %p228
      %p230 = scmp.le.s32.totalorder 1, %s23
      %p231 = scmp.lt.s32.totalorder %s23, 3
      %p232 = pnand %p230, %p231
      %p233 = pneg %p232
      // Predicated region
      $region9: #{tpu_custom_call.1} parent=5 // pred_check
        _
      $region10: #{tpu_custom_call.1} parent=5 // pred_check_branch
        %235 = sbr.rel (%p232) target = $region12
      $region11: #{tpu_custom_call.1} parent=5 // pred_region
        %s236 = ssub.s32 %s23, 1
        // Predicated region
        $region13: #{tpu_custom_call.1} parent=11 // pred_check
          %p237 = pneg %p70
        $region14: #{tpu_custom_call.1} parent=11 // pred_check_branch
          %239 = sbr.rel (%p237) target = $region16
        $region15: #{tpu_custom_call.1} parent=11 // pred_region
          %s241 = ssub.s32 2048, 2048
          %242 = vsyncadd [#allocation9], %s241
          %s243 = sshll.u32 [#allocation8], 4
          %s244 = int_to_ptr.vmem [resolvable:$true] %s243
          %249 = dma.hbm_to_vmem [thread:$0]  %s1, 2048, %s244, [#allocation9], 128, 128, 8
        $region16: #{tpu_custom_call.1} parent=11 // pred_fallthru
          _
        // Predicated region
        $region17: #{tpu_custom_call.1} parent=11 // pred_check
          %p250 = pneg %p91
        $region18: #{tpu_custom_call.1} parent=11 // pred_check_branch
          %252 = sbr.rel (%p250) target = $region20
        $region19: #{tpu_custom_call.1} parent=11 // pred_region
          %s254 = ssub.s32 64, 64
          %255 = vsyncadd [#allocation9], %s254
          %s257 = sshll.u32 [#allocation10], 4
          %s258 = int_to_ptr.vmem [resolvable:$true] %s257
          %260 = dma.hbm_to_vmem [thread:$0]  %s2, 64, %s258, [#allocation9]
        $region20: #{tpu_custom_call.1} parent=11 // pred_fallthru
          _
        // Predicated region
        $region21: #{tpu_custom_call.1} parent=11 // pred_check
          %p261 = pneg %p112
        $region22: #{tpu_custom_call.1} parent=11 // pred_check_branch
          %263 = sbr.rel (%p261) target = $region24
        $region23: #{tpu_custom_call.1} parent=11 // pred_region
          %s265 = ssub.s32 2048, 2048
          %266 = vsyncadd [#allocation12], %s265
          %s267 = sshll.u32 [#allocation11], 4
          %s268 = int_to_ptr.vmem [resolvable:$true] %s267
          %273 = dma.hbm_to_vmem [thread:$0]  %s3, 2048, %s268, [#allocation12], 128, 128, 8
        $region24: #{tpu_custom_call.1} parent=11 // pred_fallthru
          _
        // Predicated region
        $region25: #{tpu_custom_call.1} parent=11 // pred_check
          %p274 = pneg %p133
        $region26: #{tpu_custom_call.1} parent=11 // pred_check_branch
          %276 = sbr.rel (%p274) target = $region28
        $region27: #{tpu_custom_call.1} parent=11 // pred_region
          _
        $region28: #{tpu_custom_call.1} parent=11 // pred_fallthru
          _
        // Predicated region
        $region29: #{tpu_custom_call.1} parent=11 // pred_check
          %p277 = pneg %p154
        $region30: #{tpu_custom_call.1} parent=11 // pred_check_branch
          %279 = sbr.rel (%p277) target = $region32
        $region31: #{tpu_custom_call.1} parent=11 // pred_region
          %s281 = ssub.s32 1024, 1024
          %282 = vsyncadd [#allocation12], %s281
          %s283 = sshll.u32 [#allocation13], 4
          %s284 = int_to_ptr.vmem [resolvable:$true] %s283
          %289 = dma.hbm_to_vmem [thread:$0]  %s5, 1024, %s284, [#allocation12], 64, 64, 4
        $region32: #{tpu_custom_call.1} parent=11 // pred_fallthru
          _
        // Predicated region
        $region33: #{tpu_custom_call.1} parent=11 // pred_check
          %p290 = pneg %p175
        $region34: #{tpu_custom_call.1} parent=11 // pred_check_branch
          %292 = sbr.rel (%p290) target = $region36
        $region35: #{tpu_custom_call.1} parent=11 // pred_region
          %s294 = ssub.s32 4096, 4096
          %295 = vsyncadd [#allocation15], %s294
          %s296 = sshll.u32 [#allocation14], 4
          %s297 = int_to_ptr.vmem [resolvable:$true] %s296
          %302 = dma.hbm_to_vmem [thread:$0]  %s6, 4096, %s297, [#allocation15], 256, 256, 16
        $region36: #{tpu_custom_call.1} parent=11 // pred_fallthru
          _
        // Predicated region
        $region37: #{tpu_custom_call.1} parent=11 // pred_check
          %p303 = pneg %p196
        $region38: #{tpu_custom_call.1} parent=11 // pred_check_branch
          %305 = sbr.rel (%p303) target = $region40
        $region39: #{tpu_custom_call.1} parent=11 // pred_region
          %s307 = ssub.s32 2048, 2048
          %308 = vsyncadd [#allocation15], %s307
          %s309 = sshll.u32 [#allocation16], 4
          %s310 = int_to_ptr.vmem [resolvable:$true] %s309
          %315 = dma.hbm_to_vmem [thread:$0]  %s7, 2048, %s310, [#allocation15], 64, 64, 4
        $region40: #{tpu_custom_call.1} parent=11 // pred_fallthru
          _
      $region12: #{tpu_custom_call.1} parent=5 // pred_fallthru
        _
      %p316 = scmp.lt.s32.totalorder %s23, 2
      // Predicated region
      $region41: #{tpu_custom_call.1} parent=5 // pred_check
        %p317 = pneg %p316
      $region42: #{tpu_custom_call.1} parent=5 // pred_check_branch
        %319 = sbr.rel (%p317) target = $region44
      $region43: #{tpu_custom_call.1} parent=5 // pred_region
        // Predicated region
        $region45: #{tpu_custom_call.1} parent=43 // pred_check
          %p320 = pneg %p43
        $region46: #{tpu_custom_call.1} parent=43 // pred_check_branch
          %322 = sbr.rel (%p320) target = $region48
        $region47: #{tpu_custom_call.1} parent=43 // pred_region
          %s323 = sand.u32 %s33, 1
          %s324 = scalar_lea.sflag [#allocation6], %s323
          %s325 = sand.u32 %s33, 1
          %s326 = smul.addr %s325, 64
          %s327 = scalar_lea.vmem [#allocation5], %s326
          %s328 = smul.u32 2, %s23
          %s330 = ssub.s32 1024, 1024
          %331 = vsyncadd %s324, %s330
          %s332 = smul.addr %s328, 4
          %s333 = smul.addr %s332, 128
          %s334 = scalar_lea.hbm %s0, %s333
          %s335 = sshll.u32 %s327, 4
          %s336 = int_to_ptr.vmem [resolvable:$true] %s335
          %341 = dma.hbm_to_vmem [thread:$0]  %s334, 1024, %s336, %s324, 128, 128, 8
        $region48: #{tpu_custom_call.1} parent=43 // pred_fallthru
          _
      $region44: #{tpu_custom_call.1} parent=5 // pred_fallthru
        _
      %p342 = scmp.le.s32.totalorder 1, %s23
      %p343 = scmp.lt.s32.totalorder %s23, 3
      %p344 = pnand %p342, %p343
      %p345 = pneg %p344
      // Predicated region
      $region49: #{tpu_custom_call.1} parent=5 // pred_check
        _
      $region50: #{tpu_custom_call.1} parent=5 // pred_check_branch
        %347 = sbr.rel (%p344) target = $region52
      $region51: #{tpu_custom_call.1} parent=5 // pred_region
        %s348 = ssub.s32 %s23, 1
        %s349 = sand.u32 %s36, 1
        %s350 = scalar_lea.sflag [#allocation6], %s349
        %s351 = sand.u32 %s36, 1
        %s352 = smul.addr %s351, 64
        %s353 = scalar_lea.vmem [#allocation5], %s352
        // Predicated region
        $region53: #{tpu_custom_call.1} parent=51 // pred_check
          %p354 = pneg %p49
        $region54: #{tpu_custom_call.1} parent=51 // pred_check_branch
          %356 = sbr.rel (%p354) target = $region56
        $region55: #{tpu_custom_call.1} parent=51 // pred_region
          %357 = dma.done %s350, 1024
        $region56: #{tpu_custom_call.1} parent=51 // pred_fallthru
          _
        // Predicated region
        $region57: #{tpu_custom_call.1} parent=51 // pred_check
          %p358 = pneg %p70
        $region58: #{tpu_custom_call.1} parent=51 // pred_check_branch
          %360 = sbr.rel (%p358) target = $region60
        $region59: #{tpu_custom_call.1} parent=51 // pred_region
          %361 = dma.done [#allocation9], 2048
        $region60: #{tpu_custom_call.1} parent=51 // pred_fallthru
          _
        // Predicated region
        $region61: #{tpu_custom_call.1} parent=51 // pred_check
          %p362 = pneg %p91
        $region62: #{tpu_custom_call.1} parent=51 // pred_check_branch
          %364 = sbr.rel (%p362) target = $region64
        $region63: #{tpu_custom_call.1} parent=51 // pred_region
          %365 = dma.done [#allocation9], 64
        $region64: #{tpu_custom_call.1} parent=51 // pred_fallthru
          _
        // Predicated region
        $region65: #{tpu_custom_call.1} parent=51 // pred_check
          %p366 = pneg %p112
        $region66: #{tpu_custom_call.1} parent=51 // pred_check_branch
          %368 = sbr.rel (%p366) target = $region68
        $region67: #{tpu_custom_call.1} parent=51 // pred_region
          %369 = dma.done [#allocation12], 2048
        $region68: #{tpu_custom_call.1} parent=51 // pred_fallthru
          _
        // Predicated region
        $region69: #{tpu_custom_call.1} parent=51 // pred_check
          %p370 = pneg %p154
        $region70: #{tpu_custom_call.1} parent=51 // pred_check_branch
          %372 = sbr.rel (%p370) target = $region72
        $region71: #{tpu_custom_call.1} parent=51 // pred_region
          %373 = dma.done [#allocation12], 1024
        $region72: #{tpu_custom_call.1} parent=51 // pred_fallthru
          _
        // Predicated region
        $region73: #{tpu_custom_call.1} parent=51 // pred_check
          %p374 = pneg %p175
        $region74: #{tpu_custom_call.1} parent=51 // pred_check_branch
          %376 = sbr.rel (%p374) target = $region76
        $region75: #{tpu_custom_call.1} parent=51 // pred_region
          %377 = dma.done [#allocation15], 4096
        $region76: #{tpu_custom_call.1} parent=51 // pred_fallthru
          _
        // Predicated region
        $region77: #{tpu_custom_call.1} parent=51 // pred_check
          %p378 = pneg %p196
        $region78: #{tpu_custom_call.1} parent=51 // pred_check_branch
          %380 = sbr.rel (%p378) target = $region80
        $region79: #{tpu_custom_call.1} parent=51 // pred_region
          %381 = dma.done [#allocation15], 2048
        $region80: #{tpu_custom_call.1} parent=51 // pred_fallthru
          _
        %s382 = sand.u32 %s36, 1
        %s383 = scalar_lea.sflag [#allocation6], %s382
        %s384 = sand.u32 %s36, 1
        %s385 = smul.addr %s384, 64
        %s386 = scalar_lea.vmem [#allocation5], %s385
        %p387 = pneg %p49
        %p388 = pneg %p46
        %p389 = pneg %p70
        %p390 = pneg %p67
        %p391 = pneg %p91
        %p392 = pneg %p88
        %p393 = pneg %p112
        %p394 = pneg %p109
        %p395 = pneg %p133
        %p396 = pneg %p130
        %p397 = pneg %p154
        %p398 = pneg %p151
        %p399 = pneg %p175
        %p400 = pneg %p172
        %p401 = pneg %p196
        %p402 = pneg %p193
        %p403 = pneg %p222
        %p404 = pneg %p219
        %s405 = sand.u32 %s209, 1
        %s406 = scalar_lea.sflag [#allocation7], %s405
        %s407 = sand.u32 %s209, 1
        %s408 = smul.addr %s407, 64
        %s409 = scalar_lea.vmem [#allocation17], %s408
        %s410 = smul.u32 2, %s28
        %s411 = smul.u32 2, %s28
        %v413 = vld [vmem:[%s353] sm:$0xff]
        %v414 = vld [vmem:[%s353 + $0x8] sm:$0xff]
        %v415 = vld [vmem:[%s353 + $0x10] sm:$0xff]
        %v416 = vld [vmem:[%s353 + $0x18] sm:$0xff]
        %v417 = vld [vmem:[%s353 + $0x20] sm:$0xff]
        %v418 = vld [vmem:[%s353 + $0x28] sm:$0xff]
        %v419 = vld [vmem:[%s353 + $0x30] sm:$0xff]
        %v420 = vld [vmem:[%s353 + $0x38] sm:$0xff]
        %v421 = vmul.f32 %v413, %v413
        %v422 = vmul.f32 %v414, %v414
        %v423 = vmul.f32 %v415, %v415
        %v424 = vmul.f32 %v416, %v416
        %v425 = vmul.f32 %v417, %v417
        %v426 = vmul.f32 %v418, %v418
        %v427 = vmul.f32 %v419, %v419
        %v428 = vmul.f32 %v420, %v420
        %429 = vadd.xlane.f32.xlu0 %v421
        %v430 = vpop.xlane.xlu0 %429
        %431 = vadd.xlane.f32.xlu0 %v422
        %v432 = vpop.xlane.xlu0 %431
        %433 = vadd.xlane.f32.xlu0 %v423
        %v434 = vpop.xlane.xlu0 %433
        %435 = vadd.xlane.f32.xlu0 %v424
        %v436 = vpop.xlane.xlu0 %435
        %437 = vadd.xlane.f32.xlu0 %v425
        %v438 = vpop.xlane.xlu0 %437
        %439 = vadd.xlane.f32.xlu0 %v426
        %v440 = vpop.xlane.xlu0 %439
        %441 = vadd.xlane.f32.xlu0 %v427
        %v442 = vpop.xlane.xlu0 %441
        %443 = vadd.xlane.f32.xlu0 %v428
        %v444 = vpop.xlane.xlu0 %443
        %v445 = vrcp.pop 128.0
        %v446 = vmul.f32 %v430, %v445
        %v447 = vmul.f32 %v432, %v445
        %v448 = vmul.f32 %v434, %v445
        %v449 = vmul.f32 %v436, %v445
        %v450 = vmul.f32 %v438, %v445
        %v451 = vmul.f32 %v440, %v445
        %v452 = vmul.f32 %v442, %v445
        %v453 = vmul.f32 %v444, %v445
        %v454 = vadd.f32 %v446, 1e-05
        %v455 = vadd.f32 %v447, 1e-05
        %v456 = vadd.f32 %v448, 1e-05
        %v457 = vadd.f32 %v449, 1e-05
        %v458 = vadd.f32 %v450, 1e-05
        %v459 = vadd.f32 %v451, 1e-05
        %v460 = vadd.f32 %v452, 1e-05
        %v461 = vadd.f32 %v453, 1e-05
        %v462 = vrsqrt.pop %v454
        %v463 = vrsqrt.pop %v455
        %v464 = vrsqrt.pop %v456
        %v465 = vrsqrt.pop %v457
        %v466 = vrsqrt.pop %v458
        %v467 = vrsqrt.pop %v459
        %v468 = vrsqrt.pop %v460
        %v469 = vrsqrt.pop %v461
        %v470 = vmul.f32 %v413, %v462
        %v471 = vmul.f32 %v414, %v463
        %v472 = vmul.f32 %v415, %v464
        %v473 = vmul.f32 %v416, %v465
        %v474 = vmul.f32 %v417, %v466
        %v475 = vmul.f32 %v418, %v467
        %v476 = vmul.f32 %v419, %v468
        %v477 = vmul.f32 %v420, %v469
        %v478 = vpack.c.bf16 %v471, %v470
        %v479 = vpack.c.bf16 %v473, %v472
        %v480 = vpack.c.bf16 %v475, %v474
        %v481 = vpack.c.bf16 %v477, %v476
        %v482 = vld [vmem:[#allocation8] sm:$0xff]
        %v483 = vld [vmem:[#allocation8 + $0x8] sm:$0xff]
        %v484 = vld [vmem:[#allocation8 + $0x10] sm:$0xff]
        %v485 = vld [vmem:[#allocation8 + $0x18] sm:$0xff]
        %v486 = vld [vmem:[#allocation8 + $0x20] sm:$0xff]
        %v487 = vld [vmem:[#allocation8 + $0x28] sm:$0xff]
        %v488 = vld [vmem:[#allocation8 + $0x30] sm:$0xff]
        %v489 = vld [vmem:[#allocation8 + $0x38] sm:$0xff]
        %v490 = vld [vmem:[#allocation8 + $0x40] sm:$0xff]
        %v491 = vld [vmem:[#allocation8 + $0x48] sm:$0xff]
        %v492 = vld [vmem:[#allocation8 + $0x50] sm:$0xff]
        %v493 = vld [vmem:[#allocation8 + $0x58] sm:$0xff]
        %v494 = vld [vmem:[#allocation8 + $0x60] sm:$0xff]
        %v495 = vld [vmem:[#allocation8 + $0x68] sm:$0xff]
        %v496 = vld [vmem:[#allocation8 + $0x70] sm:$0xff]
        %v497 = vld [vmem:[#allocation8 + $0x78] sm:$0xff]
        %v514 = vunpack.c.l.b16 %v482
        %v515 = vunpack.c.h.b16 %v482
        %v516 = vunpack.c.l.b16 %v483
        %v517 = vunpack.c.h.b16 %v483
        %v518 = vunpack.c.l.b16 %v484
        %v519 = vunpack.c.h.b16 %v484
        %v520 = vunpack.c.l.b16 %v485
        %v521 = vunpack.c.h.b16 %v485
        %v522 = vunpack.c.l.b16 %v486
        %v523 = vunpack.c.h.b16 %v486
        %v524 = vunpack.c.l.b16 %v487
        %v525 = vunpack.c.h.b16 %v487
        %v526 = vunpack.c.l.b16 %v488
        %v527 = vunpack.c.h.b16 %v488
        %v528 = vunpack.c.l.b16 %v489
        %v529 = vunpack.c.h.b16 %v489
        %v530 = vunpack.c.l.b16 %v490
        %v531 = vunpack.c.h.b16 %v490
        %v532 = vunpack.c.l.b16 %v491
        %v533 = vunpack.c.h.b16 %v491
        %v534 = vunpack.c.l.b16 %v492
        %v535 = vunpack.c.h.b16 %v492
        %v536 = vunpack.c.l.b16 %v493
        %v537 = vunpack.c.h.b16 %v493
        %v538 = vunpack.c.l.b16 %v494
        %v539 = vunpack.c.h.b16 %v494
        %v540 = vunpack.c.l.b16 %v495
        %v541 = vunpack.c.h.b16 %v495
        %v542 = vunpack.c.l.b16 %v496
        %v543 = vunpack.c.h.b16 %v496
        %v544 = vunpack.c.l.b16 %v497
        %v545 = vunpack.c.h.b16 %v497
        %v546 = vpack.c.b16 %v516, %v514
        %v547 = vpack.c.b16 %v517, %v515
        %v548 = vpack.c.b16 %v520, %v518
        %v549 = vpack.c.b16 %v521, %v519
        %v550 = vpack.c.b16 %v524, %v522
        %v551 = vpack.c.b16 %v525, %v523
        %v552 = vpack.c.b16 %v528, %v526
        %v553 = vpack.c.b16 %v529, %v527
        %v554 = vpack.c.b16 %v532, %v530
        %v555 = vpack.c.b16 %v533, %v531
        %v556 = vpack.c.b16 %v536, %v534
        %v557 = vpack.c.b16 %v537, %v535
        %v558 = vpack.c.b16 %v540, %v538
        %v559 = vpack.c.b16 %v541, %v539
        %v560 = vpack.c.b16 %v544, %v542
        %v561 = vpack.c.b16 %v545, %v543
        %578 = vmatprep.subr.bf16.mxu0 %v561
        %579 = vmatpush1.bf16.msra.mxu0 %v560
        %580 = vmatprep.subr.bf16.mxu0 %v559
        %581 = vmatpush1.bf16.msra.mxu0 %v558
        %582 = vmatprep.subr.bf16.mxu0 %v557
        %583 = vmatpush1.bf16.msra.mxu0 %v556
        %584 = vmatprep.subr.bf16.mxu0 %v555
        %585 = vmatpush1.bf16.msra.mxu0 %v554
        %586 = vmatprep.subr.bf16.mxu0 %v553
        %587 = vmatpush1.bf16.msra.mxu0 %v552
        %588 = vmatprep.subr.bf16.mxu0 %v551
        %589 = vmatpush1.bf16.msra.mxu0 %v550
        %590 = vmatprep.subr.bf16.mxu0 %v549
        %591 = vmatpush1.bf16.msra.mxu0 %v548
        %592 = vmatprep.subr.bf16.mxu0 %v547
        %593 = vmatpush1.bf16.msra.mxu0 %v546
        %594 = vmatprep.subr.bf16.mxu0 0
        %595 = vmatpush2.bf16.msra.mxu0 0
        %596 = vmatprep.subr.bf16.mxu0 0
        %597 = vmatpush2.bf16.msra.mxu0 0
        %598 = vmatprep.subr.bf16.mxu0 0
        %599 = vmatpush2.bf16.msra.mxu0 0
        %600 = vmatprep.subr.bf16.mxu0 0
        %601 = vmatpush2.bf16.msra.mxu0 0
        %602 = vmatprep.subr.bf16.mxu0 0
        %603 = vmatpush2.bf16.msra.mxu0 0
        %604 = vmatprep.subr.bf16.mxu0 0
        %605 = vmatpush2.bf16.msra.mxu0 0
        %606 = vmatprep.subr.bf16.mxu0 0
        %607 = vmatpush2.bf16.msra.mxu0 0
        %608 = vmatprep.subr.bf16.mxu0 0
        %609 = vmatpush2.bf16.msra.mxu0 0
        %610 = vmatprep.mubr.bf16.mxu0 0
        %611 = vmatmul.mubr.bf16.gmra.mxu0 %v478
        %v612 = vpop.f32.mrf.mxu0
        %v613 = vadd.f32 0.0, %v612
        %v614 = vpop.f32.mrf.mxu0
        %v615 = vadd.f32 0.0, %v614
        %v616 = vpop.f32.mrf.mxu0
        %v617 = vadd.f32 0.0, %v616
        %v618 = vpop.f32.mrf.mxu0
        %v619 = vadd.f32 0.0, %v618
        %620 = vmatprep.mubr.bf16.mxu0 0
        %621 = vmatmul.mubr.bf16.gmra.mxu0 %v479
        %v622 = vpop.f32.mrf.mxu0
        %v623 = vadd.f32 0.0, %v622
        %v624 = vpop.f32.mrf.mxu0
        %v625 = vadd.f32 0.0, %v624
        %v626 = vpop.f32.mrf.mxu0
        %v627 = vadd.f32 0.0, %v626
        %v628 = vpop.f32.mrf.mxu0
        %v629 = vadd.f32 0.0, %v628
        %630 = vmatprep.mubr.bf16.mxu0 0
        %631 = vmatmul.mubr.bf16.gmra.mxu0 %v480
        %v632 = vpop.f32.mrf.mxu0
        %v633 = vadd.f32 0.0, %v632
        %v634 = vpop.f32.mrf.mxu0
        %v635 = vadd.f32 0.0, %v634
        %v636 = vpop.f32.mrf.mxu0
        %v637 = vadd.f32 0.0, %v636
        %v638 = vpop.f32.mrf.mxu0
        %v639 = vadd.f32 0.0, %v638
        %640 = vmatprep.mubr.bf16.mxu0 0
        %641 = vmatmul.mubr.bf16.gmra.mxu0 %v481
        %v642 = vpop.f32.mrf.mxu0
        %v643 = vadd.f32 0.0, %v642
        %v644 = vpop.f32.mrf.mxu0
        %v645 = vadd.f32 0.0, %v644
        %v646 = vpop.f32.mrf.mxu0
        %v647 = vadd.f32 0.0, %v646
        %v648 = vpop.f32.mrf.mxu0
        %v649 = vadd.f32 0.0, %v648
        %650 = vdwg.mxu0
        %651 = vst [vmem:[#allocation2] sm:$0xff] 0.0
        %652 = vst [vmem:[#allocation2 + $0x28] sm:$0xff] 0.0
        %653 = vst [vmem:[#allocation2 + $0x8] sm:$0xff] %v615
        %654 = vst [vmem:[#allocation2 + $0x10] sm:$0xff] %v619
        %655 = vst [vmem:[#allocation2 + $0x18] sm:$0xff] %v625
        %656 = vst [vmem:[#allocation2 + $0x20] sm:$0xff] %v629
        %657 = vst [vmem:[#allocation2 + $0x30] sm:$0xff] %v635
        %658 = vst [vmem:[#allocation2 + $0x38] sm:$0xff] %v639
        %659 = vst [vmem:[#allocation2 + $0x40] sm:$0xff] %v645
        %660 = vst [vmem:[#allocation2 + $0x48] sm:$0xff] %v649
        %v661 = vld [vmem:[#allocation10 + $0x3] sm:$0x1]
        %v662 = vld [vmem:[#allocation2 + $0x8] sm:$0xff]
        %v663 = vld [vmem:[#allocation2 + $0x10] sm:$0xff]
        %v664 = vld [vmem:[#allocation2 + $0x18] sm:$0xff]
        %v665 = vld [vmem:[#allocation2 + $0x20] sm:$0xff]
        %v666 = vld [vmem:[#allocation2 + $0x30] sm:$0xff]
        %v667 = vld [vmem:[#allocation2 + $0x38] sm:$0xff]
        %v668 = vld [vmem:[#allocation2 + $0x40] sm:$0xff]
        %v669 = vld [vmem:[#allocation2 + $0x48] sm:$0xff]
        %v670 = vlaneseq
        %v671 = vshrl.u32 %v670, 7
        %v672 = vsub.s32 0, %v671
        %v673 = vrot.slane %v661, %v672
        %v674 = vmul.f32 %v673, %v662
        %v675 = vmul.f32 %v673, %v663
        %v676 = vmul.f32 %v673, %v664
        %v677 = vmul.f32 %v673, %v665
        %v678 = vmul.f32 %v673, %v666
        %v679 = vmul.f32 %v673, %v667
        %v680 = vmul.f32 %v673, %v668
        %v681 = vmul.f32 %v673, %v669
        %v682 = vadd.f32 %v674, 0.0
        %v683 = vadd.f32 %v675, 0.0
        %v684 = vadd.f32 %v676, 0.0
        %v685 = vadd.f32 %v677, 0.0
        %v686 = vadd.f32 %v678, 0.0
        %v687 = vadd.f32 %v679, 0.0
        %v688 = vadd.f32 %v680, 0.0
        %v689 = vadd.f32 %v681, 0.0
        %v690 = vld [vmem:[#allocation10 + $0x2] sm:$0x1]
        %v691 = vld [vmem:[#allocation2 + $0x7] sm:$0xff]
        %v692 = vld [vmem:[#allocation2 + $0xf] sm:$0xff]
        %v693 = vld [vmem:[#allocation2 + $0x17] sm:$0xff]
        %v694 = vld [vmem:[#allocation2 + $0x1f] sm:$0xff]
        %v695 = vld [vmem:[#allocation2 + $0x2f] sm:$0xff]
        %v696 = vld [vmem:[#allocation2 + $0x37] sm:$0xff]
        %v697 = vld [vmem:[#allocation2 + $0x3f] sm:$0xff]
        %v698 = vld [vmem:[#allocation2 + $0x47] sm:$0xff]
        %v699 = vlaneseq
        %v700 = vshrl.u32 %v699, 7
        %v701 = vsub.s32 0, %v700
        %v702 = vrot.slane %v690, %v701
        %v703 = vmul.f32 %v702, %v691
        %v704 = vmul.f32 %v702, %v692
        %v705 = vmul.f32 %v702, %v693
        %v706 = vmul.f32 %v702, %v694
        %v707 = vmul.f32 %v702, %v695
        %v708 = vmul.f32 %v702, %v696
        %v709 = vmul.f32 %v702, %v697
        %v710 = vmul.f32 %v702, %v698
        %v711 = vadd.f32 %v682, %v703
        %v712 = vadd.f32 %v683, %v704
        %v713 = vadd.f32 %v684, %v705
        %v714 = vadd.f32 %v685, %v706
        %v715 = vadd.f32 %v686, %v707
        %v716 = vadd.f32 %v687, %v708
        %v717 = vadd.f32 %v688, %v709
        %v718 = vadd.f32 %v689, %v710
        %v719 = vld [vmem:[#allocation10 + $0x1] sm:$0x1]
        %v720 = vld [vmem:[#allocation2 + $0x6] sm:$0xff]
        %v721 = vld [vmem:[#allocation2 + $0xe] sm:$0xff]
        %v722 = vld [vmem:[#allocation2 + $0x16] sm:$0xff]
        %v723 = vld [vmem:[#allocation2 + $0x1e] sm:$0xff]
        %v724 = vld [vmem:[#allocation2 + $0x2e] sm:$0xff]
        %v725 = vld [vmem:[#allocation2 + $0x36] sm:$0xff]
        %v726 = vld [vmem:[#allocation2 + $0x3e] sm:$0xff]
        %v727 = vld [vmem:[#allocation2 + $0x46] sm:$0xff]
        %v728 = vlaneseq
        %v729 = vshrl.u32 %v728, 7
        %v730 = vsub.s32 0, %v729
        %v731 = vrot.slane %v719, %v730
        %v732 = vmul.f32 %v731, %v720
        %v733 = vmul.f32 %v731, %v721
        %v734 = vmul.f32 %v731, %v722
        %v735 = vmul.f32 %v731, %v723
        %v736 = vmul.f32 %v731, %v724
        %v737 = vmul.f32 %v731, %v725
        %v738 = vmul.f32 %v731, %v726
        %v739 = vmul.f32 %v731, %v727
        %v740 = vadd.f32 %v711, %v732
        %v741 = vadd.f32 %v712, %v733
        %v742 = vadd.f32 %v713, %v734
        %v743 = vadd.f32 %v714, %v735
        %v744 = vadd.f32 %v715, %v736
        %v745 = vadd.f32 %v716, %v737
        %v746 = vadd.f32 %v717, %v738
        %v747 = vadd.f32 %v718, %v739
        %v748 = vld [vmem:[#allocation10] sm:$0x1]
        %v749 = vld [vmem:[#allocation2 + $0x5] sm:$0xff]
        %v750 = vld [vmem:[#allocation2 + $0xd] sm:$0xff]
        %v751 = vld [vmem:[#allocation2 + $0x15] sm:$0xff]
        %v752 = vld [vmem:[#allocation2 + $0x1d] sm:$0xff]
        %v753 = vld [vmem:[#allocation2 + $0x2d] sm:$0xff]
        %v754 = vld [vmem:[#allocation2 + $0x35] sm:$0xff]
        %v755 = vld [vmem:[#allocation2 + $0x3d] sm:$0xff]
        %v756 = vld [vmem:[#allocation2 + $0x45] sm:$0xff]
        %v757 = vlaneseq
        %v758 = vshrl.u32 %v757, 7
        %v759 = vsub.s32 0, %v758
        %v760 = vrot.slane %v748, %v759
        %v761 = vmul.f32 %v760, %v749
        %v762 = vmul.f32 %v760, %v750
        %v763 = vmul.f32 %v760, %v751
        %v764 = vmul.f32 %v760, %v752
        %v765 = vmul.f32 %v760, %v753
        %v766 = vmul.f32 %v760, %v754
        %v767 = vmul.f32 %v760, %v755
        %v768 = vmul.f32 %v760, %v756
        %v769 = vadd.f32 %v740, %v761
        %v770 = vadd.f32 %v741, %v762
        %v771 = vadd.f32 %v742, %v763
        %v772 = vadd.f32 %v743, %v764
        %v773 = vadd.f32 %v744, %v765
        %v774 = vadd.f32 %v745, %v766
        %v775 = vadd.f32 %v746, %v767
        %v776 = vadd.f32 %v747, %v768
        %v777 = vpack.c.bf16 %v770, %v769
        %v778 = vpack.c.bf16 %v772, %v771
        %v779 = vpack.c.bf16 %v774, %v773
        %v780 = vpack.c.bf16 %v776, %v775
        %v781 = vld [vmem:[#allocation11] sm:$0xff]
        %v782 = vld [vmem:[#allocation11 + $0x8] sm:$0xff]
        %v783 = vld [vmem:[#allocation11 + $0x10] sm:$0xff]
        %v784 = vld [vmem:[#allocation11 + $0x18] sm:$0xff]
        %v785 = vld [vmem:[#allocation11 + $0x20] sm:$0xff]
        %v786 = vld [vmem:[#allocation11 + $0x28] sm:$0xff]
        %v787 = vld [vmem:[#allocation11 + $0x30] sm:$0xff]
        %v788 = vld [vmem:[#allocation11 + $0x38] sm:$0xff]
        %v789 = vld [vmem:[#allocation11 + $0x40] sm:$0xff]
        %v790 = vld [vmem:[#allocation11 + $0x48] sm:$0xff]
        %v791 = vld [vmem:[#allocation11 + $0x50] sm:$0xff]
        %v792 = vld [vmem:[#allocation11 + $0x58] sm:$0xff]
        %v793 = vld [vmem:[#allocation11 + $0x60] sm:$0xff]
        %v794 = vld [vmem:[#allocation11 + $0x68] sm:$0xff]
        %v795 = vld [vmem:[#allocation11 + $0x70] sm:$0xff]
        %v796 = vld [vmem:[#allocation11 + $0x78] sm:$0xff]
        %v813 = vunpack.c.l.b16 %v781
        %v814 = vunpack.c.h.b16 %v781
        %v815 = vunpack.c.l.b16 %v782
        %v816 = vunpack.c.h.b16 %v782
        %v817 = vunpack.c.l.b16 %v783
        %v818 = vunpack.c.h.b16 %v783
        %v819 = vunpack.c.l.b16 %v784
        %v820 = vunpack.c.h.b16 %v784
        %v821 = vunpack.c.l.b16 %v785
        %v822 = vunpack.c.h.b16 %v785
        %v823 = vunpack.c.l.b16 %v786
        %v824 = vunpack.c.h.b16 %v786
        %v825 = vunpack.c.l.b16 %v787
        %v826 = vunpack.c.h.b16 %v787
        %v827 = vunpack.c.l.b16 %v788
        %v828 = vunpack.c.h.b16 %v788
        %v829 = vunpack.c.l.b16 %v789
        %v830 = vunpack.c.h.b16 %v789
        %v831 = vunpack.c.l.b16 %v790
        %v832 = vunpack.c.h.b16 %v790
        %v833 = vunpack.c.l.b16 %v791
        %v834 = vunpack.c.h.b16 %v791
        %v835 = vunpack.c.l.b16 %v792
        %v836 = vunpack.c.h.b16 %v792
        %v837 = vunpack.c.l.b16 %v793
        %v838 = vunpack.c.h.b16 %v793
        %v839 = vunpack.c.l.b16 %v794
        %v840 = vunpack.c.h.b16 %v794
        %v841 = vunpack.c.l.b16 %v795
        %v842 = vunpack.c.h.b16 %v795
        %v843 = vunpack.c.l.b16 %v796
        %v844 = vunpack.c.h.b16 %v796
        %v845 = vpack.c.b16 %v815, %v813
        %v846 = vpack.c.b16 %v816, %v814
        %v847 = vpack.c.b16 %v819, %v817
        %v848 = vpack.c.b16 %v820, %v818
        %v849 = vpack.c.b16 %v823, %v821
        %v850 = vpack.c.b16 %v824, %v822
        %v851 = vpack.c.b16 %v827, %v825
        %v852 = vpack.c.b16 %v828, %v826
        %v853 = vpack.c.b16 %v831, %v829
        %v854 = vpack.c.b16 %v832, %v830
        %v855 = vpack.c.b16 %v835, %v833
        %v856 = vpack.c.b16 %v836, %v834
        %v857 = vpack.c.b16 %v839, %v837
        %v858 = vpack.c.b16 %v840, %v838
        %v859 = vpack.c.b16 %v843, %v841
        %v860 = vpack.c.b16 %v844, %v842
        %877 = vmatprep.subr.bf16.mxu0 %v860
        %878 = vmatpush1.bf16.msra.mxu0 %v859
        %879 = vmatprep.subr.bf16.mxu0 %v858
        %880 = vmatpush1.bf16.msra.mxu0 %v857
        %881 = vmatprep.subr.bf16.mxu0 %v856
        %882 = vmatpush1.bf16.msra.mxu0 %v855
        %883 = vmatprep.subr.bf16.mxu0 %v854
        %884 = vmatpush1.bf16.msra.mxu0 %v853
        %885 = vmatprep.subr.bf16.mxu0 %v852
        %886 = vmatpush1.bf16.msra.mxu0 %v851
        %887 = vmatprep.subr.bf16.mxu0 %v850
        %888 = vmatpush1.bf16.msra.mxu0 %v849
        %889 = vmatprep.subr.bf16.mxu0 %v848
        %890 = vmatpush1.bf16.msra.mxu0 %v847
        %891 = vmatprep.subr.bf16.mxu0 %v846
        %892 = vmatpush1.bf16.msra.mxu0 %v845
        %893 = vmatprep.subr.bf16.mxu0 0
        %894 = vmatpush2.bf16.msra.mxu0 0
        %895 = vmatprep.subr.bf16.mxu0 0
        %896 = vmatpush2.bf16.msra.mxu0 0
        %897 = vmatprep.subr.bf16.mxu0 0
        %898 = vmatpush2.bf16.msra.mxu0 0
        %899 = vmatprep.subr.bf16.mxu0 0
        %900 = vmatpush2.bf16.msra.mxu0 0
        %901 = vmatprep.subr.bf16.mxu0 0
        %902 = vmatpush2.bf16.msra.mxu0 0
        %903 = vmatprep.subr.bf16.mxu0 0
        %904 = vmatpush2.bf16.msra.mxu0 0
        %905 = vmatprep.subr.bf16.mxu0 0
        %906 = vmatpush2.bf16.msra.mxu0 0
        %907 = vmatprep.subr.bf16.mxu0 0
        %908 = vmatpush2.bf16.msra.mxu0 0
        %909 = vmatprep.mubr.bf16.mxu0 0
        %910 = vmatmul.mubr.bf16.gmra.mxu0 %v777
        %v911 = vpop.f32.mrf.mxu0
        %v912 = vadd.f32 0.0, %v911
        %v913 = vpop.f32.mrf.mxu0
        %v914 = vadd.f32 0.0, %v913
        %v915 = vpop.f32.mrf.mxu0
        %v916 = vadd.f32 0.0, %v915
        %v917 = vpop.f32.mrf.mxu0
        %v918 = vadd.f32 0.0, %v917
        %919 = vmatprep.mubr.bf16.mxu0 0
        %920 = vmatmul.mubr.bf16.gmra.mxu0 %v778
        %v921 = vpop.f32.mrf.mxu0
        %v922 = vadd.f32 0.0, %v921
        %v923 = vpop.f32.mrf.mxu0
        %v924 = vadd.f32 0.0, %v923
        %v925 = vpop.f32.mrf.mxu0
        %v926 = vadd.f32 0.0, %v925
        %v927 = vpop.f32.mrf.mxu0
        %v928 = vadd.f32 0.0, %v927
        %929 = vmatprep.mubr.bf16.mxu0 0
        %930 = vmatmul.mubr.bf16.gmra.mxu0 %v779
        %v931 = vpop.f32.mrf.mxu0
        %v932 = vadd.f32 0.0, %v931
        %v933 = vpop.f32.mrf.mxu0
        %v934 = vadd.f32 0.0, %v933
        %v935 = vpop.f32.mrf.mxu0
        %v936 = vadd.f32 0.0, %v935
        %v937 = vpop.f32.mrf.mxu0
        %v938 = vadd.f32 0.0, %v937
        %939 = vmatprep.mubr.bf16.mxu0 0
        %940 = vmatmul.mubr.bf16.gmra.mxu0 %v780
        %v941 = vpop.f32.mrf.mxu0
        %v942 = vadd.f32 0.0, %v941
        %v943 = vpop.f32.mrf.mxu0
        %v944 = vadd.f32 0.0, %v943
        %v945 = vpop.f32.mrf.mxu0
        %v946 = vadd.f32 0.0, %v945
        %v947 = vpop.f32.mrf.mxu0
        %v948 = vadd.f32 0.0, %v947
        %949 = vdwg.mxu0
        %v950 = vxor.u32 %v912, 2147483648
        %v951 = vxor.u32 %v916, 2147483648
        %v952 = vxor.u32 %v922, 2147483648
        %v953 = vxor.u32 %v926, 2147483648
        %v954 = vxor.u32 %v932, 2147483648
        %v955 = vxor.u32 %v936, 2147483648
        %v956 = vxor.u32 %v942, 2147483648
        %v957 = vxor.u32 %v946, 2147483648
        %v958 = vmul.f32 %v950, 1.442695
        %v959 = vpow.pop %v958
        %v960 = vmul.f32 %v951, 1.442695
        %v961 = vpow.pop %v960
        %v962 = vmul.f32 %v952, 1.442695
        %v963 = vpow.pop %v962
        %v964 = vmul.f32 %v953, 1.442695
        %v965 = vpow.pop %v964
        %v966 = vmul.f32 %v954, 1.442695
        %v967 = vpow.pop %v966
        %v968 = vmul.f32 %v955, 1.442695
        %v969 = vpow.pop %v968
        %v970 = vmul.f32 %v956, 1.442695
        %v971 = vpow.pop %v970
        %v972 = vmul.f32 %v957, 1.442695
        %v973 = vpow.pop %v972
        %v974 = vadd.f32 %v959, 1.0
        %v975 = vadd.f32 %v961, 1.0
        %v976 = vadd.f32 %v963, 1.0
        %v977 = vadd.f32 %v965, 1.0
        %v978 = vadd.f32 %v967, 1.0
        %v979 = vadd.f32 %v969, 1.0
        %v980 = vadd.f32 %v971, 1.0
        %v981 = vadd.f32 %v973, 1.0
        %v982 = vrcp.pop %v974
        %v983 = vmul.f32 1.0, %v982
        %v984 = vrcp.pop %v975
        %v985 = vmul.f32 1.0, %v984
        %v986 = vrcp.pop %v976
        %v987 = vmul.f32 1.0, %v986
        %v988 = vrcp.pop %v977
        %v989 = vmul.f32 1.0, %v988
        %v990 = vrcp.pop %v978
        %v991 = vmul.f32 1.0, %v990
        %v992 = vrcp.pop %v979
        %v993 = vmul.f32 1.0, %v992
        %v994 = vrcp.pop %v980
        %v995 = vmul.f32 1.0, %v994
        %v996 = vrcp.pop %v981
        %v997 = vmul.f32 1.0, %v996
        %v998 = vxor.u32 %v914, 2147483648
        %v999 = vxor.u32 %v918, 2147483648
        %v1000 = vxor.u32 %v924, 2147483648
        %v1001 = vxor.u32 %v928, 2147483648
        %v1002 = vxor.u32 %v934, 2147483648
        %v1003 = vxor.u32 %v938, 2147483648
        %v1004 = vxor.u32 %v944, 2147483648
        %v1005 = vxor.u32 %v948, 2147483648
        %v1006 = vmul.f32 %v998, 1.442695
        %v1007 = vpow.pop %v1006
        %v1008 = vmul.f32 %v999, 1.442695
        %v1009 = vpow.pop %v1008
        %v1010 = vmul.f32 %v1000, 1.442695
        %v1011 = vpow.pop %v1010
        %v1012 = vmul.f32 %v1001, 1.442695
        %v1013 = vpow.pop %v1012
        %v1014 = vmul.f32 %v1002, 1.442695
        %v1015 = vpow.pop %v1014
        %v1016 = vmul.f32 %v1003, 1.442695
        %v1017 = vpow.pop %v1016
        %v1018 = vmul.f32 %v1004, 1.442695
        %v1019 = vpow.pop %v1018
        %v1020 = vmul.f32 %v1005, 1.442695
        %v1021 = vpow.pop %v1020
        %v1022 = vadd.f32 %v1007, 1.0
        %v1023 = vadd.f32 %v1009, 1.0
        %v1024 = vadd.f32 %v1011, 1.0
        %v1025 = vadd.f32 %v1013, 1.0
        %v1026 = vadd.f32 %v1015, 1.0
        %v1027 = vadd.f32 %v1017, 1.0
        %v1028 = vadd.f32 %v1019, 1.0
        %v1029 = vadd.f32 %v1021, 1.0
        %v1030 = vrcp.pop %v1022
        %v1031 = vmul.f32 1.0, %v1030
        %v1032 = vrcp.pop %v1023
        %v1033 = vmul.f32 1.0, %v1032
        %v1034 = vrcp.pop %v1024
        %v1035 = vmul.f32 1.0, %v1034
        %v1036 = vrcp.pop %v1025
        %v1037 = vmul.f32 1.0, %v1036
        %v1038 = vrcp.pop %v1026
        %v1039 = vmul.f32 1.0, %v1038
        %v1040 = vrcp.pop %v1027
        %v1041 = vmul.f32 1.0, %v1040
        %v1042 = vrcp.pop %v1028
        %v1043 = vmul.f32 1.0, %v1042
        %v1044 = vrcp.pop %v1029
        %v1045 = vmul.f32 1.0, %v1044
        %v1046 = vld [vmem:[%s4] sm:$0x1]
        %v1048 = vlaneseq
        %v1049 = vshrl.u32 %v1048, 7
        %v1050 = vsub.s32 0, %v1049
        %v1051 = vrot.slane %v1046, %v1050
        %v1053 = vmul.f32 %v1051, %v1031
        %v1054 = vmul.f32 %v1051, %v1033
        %v1055 = vmul.f32 %v1051, %v1035
        %v1056 = vmul.f32 %v1051, %v1037
        %v1057 = vmul.f32 %v1051, %v1039
        %v1058 = vmul.f32 %v1051, %v1041
        %v1059 = vmul.f32 %v1051, %v1043
        %v1060 = vmul.f32 %v1051, %v1045
        %v1061 = vmul.f32 %v1053, 1.442695
        %v1062 = vpow.pop %v1061
        %v1063 = vmul.f32 %v1054, 1.442695
        %v1064 = vpow.pop %v1063
        %v1065 = vmul.f32 %v1055, 1.442695
        %v1066 = vpow.pop %v1065
        %v1067 = vmul.f32 %v1056, 1.442695
        %v1068 = vpow.pop %v1067
        %v1069 = vmul.f32 %v1057, 1.442695
        %v1070 = vpow.pop %v1069
        %v1071 = vmul.f32 %v1058, 1.442695
        %v1072 = vpow.pop %v1071
        %v1073 = vmul.f32 %v1059, 1.442695
        %v1074 = vpow.pop %v1073
        %v1075 = vmul.f32 %v1060, 1.442695
        %v1076 = vpow.pop %v1075
        %v1077 = vmul.f32 %v1062, %v1062
        %v1078 = vmul.f32 %v1064, %v1064
        %v1079 = vmul.f32 %v1066, %v1066
        %v1080 = vmul.f32 %v1068, %v1068
        %v1081 = vmul.f32 %v1070, %v1070
        %v1082 = vmul.f32 %v1072, %v1072
        %v1083 = vmul.f32 %v1074, %v1074
        %v1084 = vmul.f32 %v1076, %v1076
        %v1085 = vsub.f32 1.0, %v1077
        %v1086 = vsub.f32 1.0, %v1078
        %v1087 = vsub.f32 1.0, %v1079
        %v1088 = vsub.f32 1.0, %v1080
        %v1089 = vsub.f32 1.0, %v1081
        %v1090 = vsub.f32 1.0, %v1082
        %v1091 = vsub.f32 1.0, %v1083
        %v1092 = vsub.f32 1.0, %v1084
        %v1093 = vmax.f32 %v1085, 0.0
        %v1094 = vmax.f32 %v1086, 0.0
        %v1095 = vmax.f32 %v1087, 0.0
        %v1096 = vmax.f32 %v1088, 0.0
        %v1097 = vmax.f32 %v1089, 0.0
        %v1098 = vmax.f32 %v1090, 0.0
        %v1099 = vmax.f32 %v1091, 0.0
        %v1100 = vmax.f32 %v1092, 0.0
        %v1101 = vrsqrt.pop %v1093
        %v1102 = vmul.f32 %v1093, %v1101
        %vm1103 = vcmp.eq.f32.partialorder %v1093, inf
        %v1104 = vsel %vm1103, %v1093, %v1102
        %vm1105 = vcmp.eq.f32.partialorder %v1093, 0.0
        %v1106 = vand.u32 %v1093, 2147483648
        %v1107 = vsel %vm1105, %v1106, %v1104
        %v1108 = vrsqrt.pop %v1094
        %v1109 = vmul.f32 %v1094, %v1108
        %vm1110 = vcmp.eq.f32.partialorder %v1094, inf
        %v1111 = vsel %vm1110, %v1094, %v1109
        %vm1112 = vcmp.eq.f32.partialorder %v1094, 0.0
        %v1113 = vand.u32 %v1094, 2147483648
        %v1114 = vsel %vm1112, %v1113, %v1111
        %v1115 = vrsqrt.pop %v1095
        %v1116 = vmul.f32 %v1095, %v1115
        %vm1117 = vcmp.eq.f32.partialorder %v1095, inf
        %v1118 = vsel %vm1117, %v1095, %v1116
        %vm1119 = vcmp.eq.f32.partialorder %v1095, 0.0
        %v1120 = vand.u32 %v1095, 2147483648
        %v1121 = vsel %vm1119, %v1120, %v1118
        %v1122 = vrsqrt.pop %v1096
        %v1123 = vmul.f32 %v1096, %v1122
        %vm1124 = vcmp.eq.f32.partialorder %v1096, inf
        %v1125 = vsel %vm1124, %v1096, %v1123
        %vm1126 = vcmp.eq.f32.partialorder %v1096, 0.0
        %v1127 = vand.u32 %v1096, 2147483648
        %v1128 = vsel %vm1126, %v1127, %v1125
        %v1129 = vrsqrt.pop %v1097
        %v1130 = vmul.f32 %v1097, %v1129
        %vm1131 = vcmp.eq.f32.partialorder %v1097, inf
        %v1132 = vsel %vm1131, %v1097, %v1130
        %vm1133 = vcmp.eq.f32.partialorder %v1097, 0.0
        %v1134 = vand.u32 %v1097, 2147483648
        %v1135 = vsel %vm1133, %v1134, %v1132
        %v1136 = vrsqrt.pop %v1098
        %v1137 = vmul.f32 %v1098, %v1136
        %vm1138 = vcmp.eq.f32.partialorder %v1098, inf
        %v1139 = vsel %vm1138, %v1098, %v1137
        %vm1140 = vcmp.eq.f32.partialorder %v1098, 0.0
        %v1141 = vand.u32 %v1098, 2147483648
        %v1142 = vsel %vm1140, %v1141, %v1139
        %v1143 = vrsqrt.pop %v1099
        %v1144 = vmul.f32 %v1099, %v1143
        %vm1145 = vcmp.eq.f32.partialorder %v1099, inf
        %v1146 = vsel %vm1145, %v1099, %v1144
        %vm1147 = vcmp.eq.f32.partialorder %v1099, 0.0
        %v1148 = vand.u32 %v1099, 2147483648
        %v1149 = vsel %vm1147, %v1148, %v1146
        %v1150 = vrsqrt.pop %v1100
        %v1151 = vmul.f32 %v1100, %v1150
        %vm1152 = vcmp.eq.f32.partialorder %v1100, inf
        %v1153 = vsel %vm1152, %v1100, %v1151
        %vm1154 = vcmp.eq.f32.partialorder %v1100, 0.0
        %v1155 = vand.u32 %v1100, 2147483648
        %v1156 = vsel %vm1154, %v1155, %v1153
        %1157 = vst [vmem:[#allocation3] sm:$0xff] %v1062
        %1158 = vst [vmem:[#allocation3 + $0x8] sm:$0xff] %v1064
        %1159 = vst [vmem:[#allocation3 + $0x10] sm:$0xff] %v1066
        %1160 = vst [vmem:[#allocation3 + $0x18] sm:$0xff] %v1068
        %1161 = vst [vmem:[#allocation3 + $0x20] sm:$0xff] %v1070
        %1162 = vst [vmem:[#allocation3 + $0x28] sm:$0xff] %v1072
        %1163 = vst [vmem:[#allocation3 + $0x30] sm:$0xff] %v1074
        %1164 = vst [vmem:[#allocation3 + $0x38] sm:$0xff] %v1076
        %v1165 = vmul.f32 %v1107, %v983
        %v1166 = vmul.f32 %v1114, %v985
        %v1167 = vmul.f32 %v1121, %v987
        %v1168 = vmul.f32 %v1128, %v989
        %v1169 = vmul.f32 %v1135, %v991
        %v1170 = vmul.f32 %v1142, %v993
        %v1171 = vmul.f32 %v1149, %v995
        %v1172 = vmul.f32 %v1156, %v997
        %v1173 = vmul.f32 %v1165, %v769
        %v1174 = vmul.f32 %v1166, %v770
        %v1175 = vmul.f32 %v1167, %v771
        %v1176 = vmul.f32 %v1168, %v772
        %v1177 = vmul.f32 %v1169, %v773
        %v1178 = vmul.f32 %v1170, %v774
        %v1179 = vmul.f32 %v1171, %v775
        %v1180 = vmul.f32 %v1172, %v776
        %1181 = vst [vmem:[#allocation4] sm:$0xff] %v1173
        %1182 = vst [vmem:[#allocation4 + $0x8] sm:$0xff] %v1174
        %1183 = vst [vmem:[#allocation4 + $0x10] sm:$0xff] %v1175
        %1184 = vst [vmem:[#allocation4 + $0x18] sm:$0xff] %v1176
        %1185 = vst [vmem:[#allocation4 + $0x20] sm:$0xff] %v1177
        %1186 = vst [vmem:[#allocation4 + $0x28] sm:$0xff] %v1178
        %1187 = vst [vmem:[#allocation4 + $0x30] sm:$0xff] %v1179
        %1188 = vst [vmem:[#allocation4 + $0x38] sm:$0xff] %v1180
        loop: start=0, step=1, limit=4
        $region81: #{tpu_custom_call.1} parent=51 // loop_pre_header
          _
        $region82: #{tpu_custom_call.1} parent=51 // loop_header
          %s1190 = sphi 0, %s1194
          %p1191 = scmp.ge.s32.totalorder %s1190, 4
          %v1195 = vphi 0.0, %v1282
          %v1196 = vphi 0.0, %v1283
        $region83: #{tpu_custom_call.1} parent=51 // loop_header_branch
          %1193 = sbr.rel (%p1191) target = $region87
        $region84: #{tpu_custom_call.1} parent=51 // loop_body
          %s1197 = smul.u32 %s1190, 8
          %s1198 = scalar_lea.vmem [#allocation3], %s1197
          %v1199 = vld [vmem:[%s1198] sm:$0xff]
          %v1200 = vld [vmem:[%s1198 + $0x20] sm:$0xff]
          %s1201 = scalar_lea.vmem [#allocation4], %s1197
          %v1202 = vld [vmem:[%s1201] sm:$0xff]
          %v1203 = vld [vmem:[%s1201 + $0x20] sm:$0xff]
          %v1206 = vrot.slane %v1195, 7
          %v1207 = vrot.slane %v1196, 7
          %v1210 = vmul.f32 %v1199, %v1206
          %v1211 = vmul.f32 %v1200, %v1207
          %v1212 = vadd.f32 %v1210, %v1202
          %v1213 = vadd.f32 %v1211, %v1203
          %v1216 = vrot.slane %v1212, 7
          %v1217 = vrot.slane %v1213, 7
          %v1220 = vmul.f32 %v1199, %v1216
          %v1221 = vmul.f32 %v1200, %v1217
          %v1222 = vadd.f32 %v1220, %v1202
          %v1223 = vadd.f32 %v1221, %v1203
          %v1226 = vrot.slane %v1222, 7
          %v1227 = vrot.slane %v1223, 7
          %v1230 = vmul.f32 %v1199, %v1226
          %v1231 = vmul.f32 %v1200, %v1227
          %v1232 = vadd.f32 %v1230, %v1202
          %v1233 = vadd.f32 %v1231, %v1203
          %v1236 = vrot.slane %v1232, 7
          %v1237 = vrot.slane %v1233, 7
          %v1240 = vmul.f32 %v1199, %v1236
          %v1241 = vmul.f32 %v1200, %v1237
          %v1242 = vadd.f32 %v1240, %v1202
          %v1243 = vadd.f32 %v1241, %v1203
          %v1246 = vrot.slane %v1242, 7
          %v1247 = vrot.slane %v1243, 7
          %v1250 = vmul.f32 %v1199, %v1246
          %v1251 = vmul.f32 %v1200, %v1247
          %v1252 = vadd.f32 %v1250, %v1202
          %v1253 = vadd.f32 %v1251, %v1203
          %v1256 = vrot.slane %v1252, 7
          %v1257 = vrot.slane %v1253, 7
          %v1260 = vmul.f32 %v1199, %v1256
          %v1261 = vmul.f32 %v1200, %v1257
          %v1262 = vadd.f32 %v1260, %v1202
          %v1263 = vadd.f32 %v1261, %v1203
          %v1266 = vrot.slane %v1262, 7
          %v1267 = vrot.slane %v1263, 7
          %v1270 = vmul.f32 %v1199, %v1266
          %v1271 = vmul.f32 %v1200, %v1267
          %v1272 = vadd.f32 %v1270, %v1202
          %v1273 = vadd.f32 %v1271, %v1203
          %v1276 = vrot.slane %v1272, 7
          %v1277 = vrot.slane %v1273, 7
          %v1280 = vmul.f32 %v1199, %v1276
          %v1281 = vmul.f32 %v1200, %v1277
          %v1282 = vadd.f32 %v1280, %v1202
          %v1283 = vadd.f32 %v1281, %v1203
          %vm1284 = vcmask 1040384
          %v1285 = vsel %vm1284, %v1212, %v1222
          %v1286 = vsel %vm1284, %v1213, %v1223
          %vm1287 = vcmask 1041408
          %v1288 = vsel %vm1287, %v1285, %v1232
          %v1289 = vsel %vm1287, %v1286, %v1233
          %vm1290 = vcmask 1042432
          %v1291 = vsel %vm1290, %v1288, %v1242
          %v1292 = vsel %vm1290, %v1289, %v1243
          %vm1293 = vcmask 1043456
          %v1294 = vsel %vm1293, %v1291, %v1252
          %v1295 = vsel %vm1293, %v1292, %v1253
          %vm1296 = vcmask 1044480
          %v1297 = vsel %vm1296, %v1294, %v1262
          %v1298 = vsel %vm1296, %v1295, %v1263
          %vm1299 = vcmask 1045504
          %v1300 = vsel %vm1299, %v1297, %v1272
          %v1301 = vsel %vm1299, %v1298, %v1273
          %vm1302 = vcmask 1046528
          %v1303 = vsel %vm1302, %v1300, %v1282
          %v1304 = vsel %vm1302, %v1301, %v1283
          %1305 = vst [vmem:[%s1201] sm:$0xff] %v1303
          %1306 = vst [vmem:[%s1201 + $0x20] sm:$0xff] %v1304
        $region85: #{tpu_custom_call.1} parent=51 // loop_footer
          %s1194 = sadd.s32 1, %s1190
        $region86: #{tpu_custom_call.1} parent=51 // loop_footer_branch
          %1189 = sbr.rel target = $region82
        $region87: #{tpu_custom_call.1} parent=51 // loop_exit
          _
        %v1307 = vxor.u32 %v613, 2147483648
        %v1308 = vxor.u32 %v617, 2147483648
        %v1309 = vxor.u32 %v623, 2147483648
        %v1310 = vxor.u32 %v627, 2147483648
        %v1311 = vxor.u32 %v633, 2147483648
        %v1312 = vxor.u32 %v637, 2147483648
        %v1313 = vxor.u32 %v643, 2147483648
        %v1314 = vxor.u32 %v647, 2147483648
        %v1315 = vmul.f32 %v1307, 1.442695
        %v1316 = vpow.pop %v1315
        %v1317 = vmul.f32 %v1308, 1.442695
        %v1318 = vpow.pop %v1317
        %v1319 = vmul.f32 %v1309, 1.442695
        %v1320 = vpow.pop %v1319
        %v1321 = vmul.f32 %v1310, 1.442695
        %v1322 = vpow.pop %v1321
        %v1323 = vmul.f32 %v1311, 1.442695
        %v1324 = vpow.pop %v1323
        %v1325 = vmul.f32 %v1312, 1.442695
        %v1326 = vpow.pop %v1325
        %v1327 = vmul.f32 %v1313, 1.442695
        %v1328 = vpow.pop %v1327
        %v1329 = vmul.f32 %v1314, 1.442695
        %v1330 = vpow.pop %v1329
        %v1331 = vadd.f32 %v1316, 1.0
        %v1332 = vadd.f32 %v1318, 1.0
        %v1333 = vadd.f32 %v1320, 1.0
        %v1334 = vadd.f32 %v1322, 1.0
        %v1335 = vadd.f32 %v1324, 1.0
        %v1336 = vadd.f32 %v1326, 1.0
        %v1337 = vadd.f32 %v1328, 1.0
        %v1338 = vadd.f32 %v1330, 1.0
        %v1339 = vrcp.pop %v1331
        %v1340 = vmul.f32 1.0, %v1339
        %v1341 = vrcp.pop %v1332
        %v1342 = vmul.f32 1.0, %v1341
        %v1343 = vrcp.pop %v1333
        %v1344 = vmul.f32 1.0, %v1343
        %v1345 = vrcp.pop %v1334
        %v1346 = vmul.f32 1.0, %v1345
        %v1347 = vrcp.pop %v1335
        %v1348 = vmul.f32 1.0, %v1347
        %v1349 = vrcp.pop %v1336
        %v1350 = vmul.f32 1.0, %v1349
        %v1351 = vrcp.pop %v1337
        %v1352 = vmul.f32 1.0, %v1351
        %v1353 = vrcp.pop %v1338
        %v1354 = vmul.f32 1.0, %v1353
        %v1355 = vmul.f32 %v613, %v1340
        %v1356 = vmul.f32 %v617, %v1342
        %v1357 = vmul.f32 %v623, %v1344
        %v1358 = vmul.f32 %v627, %v1346
        %v1359 = vmul.f32 %v633, %v1348
        %v1360 = vmul.f32 %v637, %v1350
        %v1361 = vmul.f32 %v643, %v1352
        %v1362 = vmul.f32 %v647, %v1354
        %v1363 = vld [vmem:[#allocation4] sm:$0xff]
        %v1364 = vld [vmem:[#allocation4 + $0x8] sm:$0xff]
        %v1365 = vld [vmem:[#allocation4 + $0x10] sm:$0xff]
        %v1366 = vld [vmem:[#allocation4 + $0x18] sm:$0xff]
        %v1367 = vld [vmem:[#allocation4 + $0x20] sm:$0xff]
        %v1368 = vld [vmem:[#allocation4 + $0x28] sm:$0xff]
        %v1369 = vld [vmem:[#allocation4 + $0x30] sm:$0xff]
        %v1370 = vld [vmem:[#allocation4 + $0x38] sm:$0xff]
        %v1371 = vmul.f32 %v1355, %v1363
        %v1372 = vmul.f32 %v1356, %v1364
        %v1373 = vmul.f32 %v1357, %v1365
        %v1374 = vmul.f32 %v1358, %v1366
        %v1375 = vmul.f32 %v1359, %v1367
        %v1376 = vmul.f32 %v1360, %v1368
        %v1377 = vmul.f32 %v1361, %v1369
        %v1378 = vmul.f32 %v1362, %v1370
        %v1379 = vpack.c.bf16 %v1372, %v1371
        %v1380 = vpack.c.bf16 %v1374, %v1373
        %v1381 = vpack.c.bf16 %v1376, %v1375
        %v1382 = vpack.c.bf16 %v1378, %v1377
        %v1383 = vld [vmem:[#allocation13] sm:$0xf]
        %v1384 = vld [vmem:[#allocation13 + $0x4] sm:$0xf]
        %v1385 = vld [vmem:[#allocation13 + $0x8] sm:$0xf]
        %v1386 = vld [vmem:[#allocation13 + $0xc] sm:$0xf]
        %v1387 = vld [vmem:[#allocation13 + $0x10] sm:$0xf]
        %v1388 = vld [vmem:[#allocation13 + $0x14] sm:$0xf]
        %v1389 = vld [vmem:[#allocation13 + $0x18] sm:$0xf]
        %v1390 = vld [vmem:[#allocation13 + $0x1c] sm:$0xf]
        %v1391 = vld [vmem:[#allocation13 + $0x20] sm:$0xf]
        %v1392 = vld [vmem:[#allocation13 + $0x24] sm:$0xf]
        %v1393 = vld [vmem:[#allocation13 + $0x28] sm:$0xf]
        %v1394 = vld [vmem:[#allocation13 + $0x2c] sm:$0xf]
        %v1395 = vld [vmem:[#allocation13 + $0x30] sm:$0xf]
        %v1396 = vld [vmem:[#allocation13 + $0x34] sm:$0xf]
        %v1397 = vld [vmem:[#allocation13 + $0x38] sm:$0xf]
        %v1398 = vld [vmem:[#allocation13 + $0x3c] sm:$0xf]
        %v1415 = vunpack.c.l.b16 %v1383
        %v1416 = vunpack.c.l.b16 %v1384
        %v1417 = vunpack.c.l.b16 %v1385
        %v1418 = vunpack.c.l.b16 %v1386
        %v1419 = vunpack.c.l.b16 %v1387
        %v1420 = vunpack.c.l.b16 %v1388
        %v1421 = vunpack.c.l.b16 %v1389
        %v1422 = vunpack.c.l.b16 %v1390
        %v1423 = vunpack.c.l.b16 %v1391
        %v1424 = vunpack.c.l.b16 %v1392
        %v1425 = vunpack.c.l.b16 %v1393
        %v1426 = vunpack.c.l.b16 %v1394
        %v1427 = vunpack.c.l.b16 %v1395
        %v1428 = vunpack.c.l.b16 %v1396
        %v1429 = vunpack.c.l.b16 %v1397
        %v1430 = vunpack.c.l.b16 %v1398
        %v1431 = vpack.c.b16 %v1416, %v1415
        %v1432 = vpack.c.b16 %v1418, %v1417
        %v1433 = vpack.c.b16 %v1420, %v1419
        %v1434 = vpack.c.b16 %v1422, %v1421
        %v1435 = vpack.c.b16 %v1424, %v1423
        %v1436 = vpack.c.b16 %v1426, %v1425
        %v1437 = vpack.c.b16 %v1428, %v1427
        %v1438 = vpack.c.b16 %v1430, %v1429
        %1447 = vmatprep.subr.bf16.mxu0 0
        %1448 = vmatpush1.bf16.msra.mxu0 %v1438
        %1449 = vmatprep.subr.bf16.mxu0 0
        %1450 = vmatpush1.bf16.msra.mxu0 %v1437
        %1451 = vmatprep.subr.bf16.mxu0 0
        %1452 = vmatpush1.bf16.msra.mxu0 %v1436
        %1453 = vmatprep.subr.bf16.mxu0 0
        %1454 = vmatpush1.bf16.msra.mxu0 %v1435
        %1455 = vmatprep.subr.bf16.mxu0 0
        %1456 = vmatpush1.bf16.msra.mxu0 %v1434
        %1457 = vmatprep.subr.bf16.mxu0 0
        %1458 = vmatpush1.bf16.msra.mxu0 %v1433
        %1459 = vmatprep.subr.bf16.mxu0 0
        %1460 = vmatpush1.bf16.msra.mxu0 %v1432
        %1461 = vmatprep.subr.bf16.mxu0 0
        %1462 = vmatpush1.bf16.msra.mxu0 %v1431
        %1463 = vmatprep.subr.bf16.mxu0 0
        %1464 = vmatpush2.bf16.msra.mxu0 0
        %1465 = vmatprep.subr.bf16.mxu0 0
        %1466 = vmatpush2.bf16.msra.mxu0 0
        %1467 = vmatprep.subr.bf16.mxu0 0
        %1468 = vmatpush2.bf16.msra.mxu0 0
        %1469 = vmatprep.subr.bf16.mxu0 0
        %1470 = vmatpush2.bf16.msra.mxu0 0
        %1471 = vmatprep.subr.bf16.mxu0 0
        %1472 = vmatpush2.bf16.msra.mxu0 0
        %1473 = vmatprep.subr.bf16.mxu0 0
        %1474 = vmatpush2.bf16.msra.mxu0 0
        %1475 = vmatprep.subr.bf16.mxu0 0
        %1476 = vmatpush2.bf16.msra.mxu0 0
        %1477 = vmatprep.subr.bf16.mxu0 0
        %1478 = vmatpush2.bf16.msra.mxu0 0
        %1479 = vmatprep.mubr.bf16.mxu0 0
        %1480 = vmatmul.mubr.bf16.gmra.mxu0 %v1379
        %v1481 = vpop.f32.mrf.mxu0
        %v1482 = vadd.f32 0.0, %v1481
        %v1483 = vpop.f32.mrf.mxu0
        %v1484 = vpop.f32.mrf.mxu0
        %v1485 = vadd.f32 0.0, %v1484
        %v1486 = vpop.f32.mrf.mxu0
        %1487 = vmatprep.mubr.bf16.mxu0 0
        %1488 = vmatmul.mubr.bf16.gmra.mxu0 %v1380
        %v1489 = vpop.f32.mrf.mxu0
        %v1490 = vadd.f32 0.0, %v1489
        %v1491 = vpop.f32.mrf.mxu0
        %v1492 = vpop.f32.mrf.mxu0
        %v1493 = vadd.f32 0.0, %v1492
        %v1494 = vpop.f32.mrf.mxu0
        %1495 = vmatprep.mubr.bf16.mxu0 0
        %1496 = vmatmul.mubr.bf16.gmra.mxu0 %v1381
        %v1497 = vpop.f32.mrf.mxu0
        %v1498 = vadd.f32 0.0, %v1497
        %v1499 = vpop.f32.mrf.mxu0
        %v1500 = vpop.f32.mrf.mxu0
        %v1501 = vadd.f32 0.0, %v1500
        %v1502 = vpop.f32.mrf.mxu0
        %1503 = vmatprep.mubr.bf16.mxu0 0
        %1504 = vmatmul.mubr.bf16.gmra.mxu0 %v1382
        %v1505 = vpop.f32.mrf.mxu0
        %v1506 = vadd.f32 0.0, %v1505
        %v1507 = vpop.f32.mrf.mxu0
        %v1508 = vpop.f32.mrf.mxu0
        %v1509 = vadd.f32 0.0, %v1508
        %v1510 = vpop.f32.mrf.mxu0
        %1511 = vdwg.mxu0
        %v1512 = vadd.f32 %v413, %v1482
        %v1513 = vadd.f32 %v414, %v1485
        %v1514 = vadd.f32 %v415, %v1490
        %v1515 = vadd.f32 %v416, %v1493
        %v1516 = vadd.f32 %v417, %v1498
        %v1517 = vadd.f32 %v418, %v1501
        %v1518 = vadd.f32 %v419, %v1506
        %v1519 = vadd.f32 %v420, %v1509
        %v1520 = vmul.f32 %v1512, %v1512
        %v1521 = vmul.f32 %v1513, %v1513
        %v1522 = vmul.f32 %v1514, %v1514
        %v1523 = vmul.f32 %v1515, %v1515
        %v1524 = vmul.f32 %v1516, %v1516
        %v1525 = vmul.f32 %v1517, %v1517
        %v1526 = vmul.f32 %v1518, %v1518
        %v1527 = vmul.f32 %v1519, %v1519
        %1528 = vadd.xlane.f32.xlu0 %v1520
        %v1529 = vpop.xlane.xlu0 %1528
        %1530 = vadd.xlane.f32.xlu0 %v1521
        %v1531 = vpop.xlane.xlu0 %1530
        %1532 = vadd.xlane.f32.xlu0 %v1522
        %v1533 = vpop.xlane.xlu0 %1532
        %1534 = vadd.xlane.f32.xlu0 %v1523
        %v1535 = vpop.xlane.xlu0 %1534
        %1536 = vadd.xlane.f32.xlu0 %v1524
        %v1537 = vpop.xlane.xlu0 %1536
        %1538 = vadd.xlane.f32.xlu0 %v1525
        %v1539 = vpop.xlane.xlu0 %1538
        %1540 = vadd.xlane.f32.xlu0 %v1526
        %v1541 = vpop.xlane.xlu0 %1540
        %1542 = vadd.xlane.f32.xlu0 %v1527
        %v1543 = vpop.xlane.xlu0 %1542
        %v1544 = vmul.f32 %v1529, %v445
        %v1545 = vmul.f32 %v1531, %v445
        %v1546 = vmul.f32 %v1533, %v445
        %v1547 = vmul.f32 %v1535, %v445
        %v1548 = vmul.f32 %v1537, %v445
        %v1549 = vmul.f32 %v1539, %v445
        %v1550 = vmul.f32 %v1541, %v445
        %v1551 = vmul.f32 %v1543, %v445
        %v1552 = vadd.f32 %v1544, 1e-05
        %v1553 = vadd.f32 %v1545, 1e-05
        %v1554 = vadd.f32 %v1546, 1e-05
        %v1555 = vadd.f32 %v1547, 1e-05
        %v1556 = vadd.f32 %v1548, 1e-05
        %v1557 = vadd.f32 %v1549, 1e-05
        %v1558 = vadd.f32 %v1550, 1e-05
        %v1559 = vadd.f32 %v1551, 1e-05
        %v1560 = vrsqrt.pop %v1552
        %v1561 = vrsqrt.pop %v1553
        %v1562 = vrsqrt.pop %v1554
        %v1563 = vrsqrt.pop %v1555
        %v1564 = vrsqrt.pop %v1556
        %v1565 = vrsqrt.pop %v1557
        %v1566 = vrsqrt.pop %v1558
        %v1567 = vrsqrt.pop %v1559
        %v1568 = vmul.f32 %v1512, %v1560
        %v1569 = vmul.f32 %v1513, %v1561
        %v1570 = vmul.f32 %v1514, %v1562
        %v1571 = vmul.f32 %v1515, %v1563
        %v1572 = vmul.f32 %v1516, %v1564
        %v1573 = vmul.f32 %v1517, %v1565
        %v1574 = vmul.f32 %v1518, %v1566
        %v1575 = vmul.f32 %v1519, %v1567
        %v1576 = vpack.c.bf16 %v1569, %v1568
        %v1577 = vpack.c.bf16 %v1571, %v1570
        %v1578 = vpack.c.bf16 %v1573, %v1572
        %v1579 = vpack.c.bf16 %v1575, %v1574
        %v1580 = vld [vmem:[#allocation14] sm:$0xff]
        %v1581 = vld [vmem:[#allocation14 + $0x8] sm:$0xff]
        %v1582 = vld [vmem:[#allocation14 + $0x10] sm:$0xff]
        %v1583 = vld [vmem:[#allocation14 + $0x18] sm:$0xff]
        %v1584 = vld [vmem:[#allocation14 + $0x20] sm:$0xff]
        %v1585 = vld [vmem:[#allocation14 + $0x28] sm:$0xff]
        %v1586 = vld [vmem:[#allocation14 + $0x30] sm:$0xff]
        %v1587 = vld [vmem:[#allocation14 + $0x38] sm:$0xff]
        %v1588 = vld [vmem:[#allocation14 + $0x40] sm:$0xff]
        %v1589 = vld [vmem:[#allocation14 + $0x48] sm:$0xff]
        %v1590 = vld [vmem:[#allocation14 + $0x50] sm:$0xff]
        %v1591 = vld [vmem:[#allocation14 + $0x58] sm:$0xff]
        %v1592 = vld [vmem:[#allocation14 + $0x60] sm:$0xff]
        %v1593 = vld [vmem:[#allocation14 + $0x68] sm:$0xff]
        %v1594 = vld [vmem:[#allocation14 + $0x70] sm:$0xff]
        %v1595 = vld [vmem:[#allocation14 + $0x78] sm:$0xff]
        %v1596 = vld [vmem:[#allocation14 + $0x80] sm:$0xff]
        %v1597 = vld [vmem:[#allocation14 + $0x88] sm:$0xff]
        %v1598 = vld [vmem:[#allocation14 + $0x90] sm:$0xff]
        %v1599 = vld [vmem:[#allocation14 + $0x98] sm:$0xff]
        %v1600 = vld [vmem:[#allocation14 + $0xa0] sm:$0xff]
        %v1601 = vld [vmem:[#allocation14 + $0xa8] sm:$0xff]
        %v1602 = vld [vmem:[#allocation14 + $0xb0] sm:$0xff]
        %v1603 = vld [vmem:[#allocation14 + $0xb8] sm:$0xff]
        %v1604 = vld [vmem:[#allocation14 + $0xc0] sm:$0xff]
        %v1605 = vld [vmem:[#allocation14 + $0xc8] sm:$0xff]
        %v1606 = vld [vmem:[#allocation14 + $0xd0] sm:$0xff]
        %v1607 = vld [vmem:[#allocation14 + $0xd8] sm:$0xff]
        %v1608 = vld [vmem:[#allocation14 + $0xe0] sm:$0xff]
        %v1609 = vld [vmem:[#allocation14 + $0xe8] sm:$0xff]
        %v1610 = vld [vmem:[#allocation14 + $0xf0] sm:$0xff]
        %v1611 = vld [vmem:[#allocation14 + $0xf8] sm:$0xff]
        %v1644 = vunpack.c.l.b16 %v1580
        %v1645 = vunpack.c.h.b16 %v1580
        %v1646 = vunpack.c.l.b16 %v1581
        %v1647 = vunpack.c.h.b16 %v1581
        %v1648 = vunpack.c.l.b16 %v1582
        %v1649 = vunpack.c.h.b16 %v1582
        %v1650 = vunpack.c.l.b16 %v1583
        %v1651 = vunpack.c.h.b16 %v1583
        %v1652 = vunpack.c.l.b16 %v1584
        %v1653 = vunpack.c.h.b16 %v1584
        %v1654 = vunpack.c.l.b16 %v1585
        %v1655 = vunpack.c.h.b16 %v1585
        %v1656 = vunpack.c.l.b16 %v1586
        %v1657 = vunpack.c.h.b16 %v1586
        %v1658 = vunpack.c.l.b16 %v1587
        %v1659 = vunpack.c.h.b16 %v1587
        %v1660 = vunpack.c.l.b16 %v1588
        %v1661 = vunpack.c.h.b16 %v1588
        %v1662 = vunpack.c.l.b16 %v1589
        %v1663 = vunpack.c.h.b16 %v1589
        %v1664 = vunpack.c.l.b16 %v1590
        %v1665 = vunpack.c.h.b16 %v1590
        %v1666 = vunpack.c.l.b16 %v1591
        %v1667 = vunpack.c.h.b16 %v1591
        %v1668 = vunpack.c.l.b16 %v1592
        %v1669 = vunpack.c.h.b16 %v1592
        %v1670 = vunpack.c.l.b16 %v1593
        %v1671 = vunpack.c.h.b16 %v1593
        %v1672 = vunpack.c.l.b16 %v1594
        %v1673 = vunpack.c.h.b16 %v1594
        %v1674 = vunpack.c.l.b16 %v1595
        %v1675 = vunpack.c.h.b16 %v1595
        %v1676 = vunpack.c.l.b16 %v1596
        %v1677 = vunpack.c.h.b16 %v1596
        %v1678 = vunpack.c.l.b16 %v1597
        %v1679 = vunpack.c.h.b16 %v1597
        %v1680 = vunpack.c.l.b16 %v1598
        %v1681 = vunpack.c.h.b16 %v1598
        %v1682 = vunpack.c.l.b16 %v1599
        %v1683 = vunpack.c.h.b16 %v1599
        %v1684 = vunpack.c.l.b16 %v1600
        %v1685 = vunpack.c.h.b16 %v1600
        %v1686 = vunpack.c.l.b16 %v1601
        %v1687 = vunpack.c.h.b16 %v1601
        %v1688 = vunpack.c.l.b16 %v1602
        %v1689 = vunpack.c.h.b16 %v1602
        %v1690 = vunpack.c.l.b16 %v1603
        %v1691 = vunpack.c.h.b16 %v1603
        %v1692 = vunpack.c.l.b16 %v1604
        %v1693 = vunpack.c.h.b16 %v1604
        %v1694 = vunpack.c.l.b16 %v1605
        %v1695 = vunpack.c.h.b16 %v1605
        %v1696 = vunpack.c.l.b16 %v1606
        %v1697 = vunpack.c.h.b16 %v1606
        %v1698 = vunpack.c.l.b16 %v1607
        %v1699 = vunpack.c.h.b16 %v1607
        %v1700 = vunpack.c.l.b16 %v1608
        %v1701 = vunpack.c.h.b16 %v1608
        %v1702 = vunpack.c.l.b16 %v1609
        %v1703 = vunpack.c.h.b16 %v1609
        %v1704 = vunpack.c.l.b16 %v1610
        %v1705 = vunpack.c.h.b16 %v1610
        %v1706 = vunpack.c.l.b16 %v1611
        %v1707 = vunpack.c.h.b16 %v1611
        %v1708 = vpack.c.b16 %v1648, %v1644
        %v1709 = vpack.c.b16 %v1649, %v1645
        %v1710 = vpack.c.b16 %v1650, %v1646
        %v1711 = vpack.c.b16 %v1651, %v1647
        %v1712 = vpack.c.b16 %v1656, %v1652
        %v1713 = vpack.c.b16 %v1657, %v1653
        %v1714 = vpack.c.b16 %v1658, %v1654
        %v1715 = vpack.c.b16 %v1659, %v1655
        %v1716 = vpack.c.b16 %v1664, %v1660
        %v1717 = vpack.c.b16 %v1665, %v1661
        %v1718 = vpack.c.b16 %v1666, %v1662
        %v1719 = vpack.c.b16 %v1667, %v1663
        %v1720 = vpack.c.b16 %v1672, %v1668
        %v1721 = vpack.c.b16 %v1673, %v1669
        %v1722 = vpack.c.b16 %v1674, %v1670
        %v1723 = vpack.c.b16 %v1675, %v1671
        %v1724 = vpack.c.b16 %v1680, %v1676
        %v1725 = vpack.c.b16 %v1681, %v1677
        %v1726 = vpack.c.b16 %v1682, %v1678
        %v1727 = vpack.c.b16 %v1683, %v1679
        %v1728 = vpack.c.b16 %v1688, %v1684
        %v1729 = vpack.c.b16 %v1689, %v1685
        %v1730 = vpack.c.b16 %v1690, %v1686
        %v1731 = vpack.c.b16 %v1691, %v1687
        %v1732 = vpack.c.b16 %v1696, %v1692
        %v1733 = vpack.c.b16 %v1697, %v1693
        %v1734 = vpack.c.b16 %v1698, %v1694
        %v1735 = vpack.c.b16 %v1699, %v1695
        %v1736 = vpack.c.b16 %v1704, %v1700
        %v1737 = vpack.c.b16 %v1705, %v1701
        %v1738 = vpack.c.b16 %v1706, %v1702
        %v1739 = vpack.c.b16 %v1707, %v1703
        %1772 = vmatprep.subr.bf16.mxu0 %v1737
        %1773 = vmatpush1.bf16.msra.mxu0 %v1736
        %1774 = vmatprep.subr.bf16.mxu0 %v1733
        %1775 = vmatpush1.bf16.msra.mxu0 %v1732
        %1776 = vmatprep.subr.bf16.mxu0 %v1729
        %1777 = vmatpush1.bf16.msra.mxu0 %v1728
        %1778 = vmatprep.subr.bf16.mxu0 %v1725
        %1779 = vmatpush1.bf16.msra.mxu0 %v1724
        %1780 = vmatprep.subr.bf16.mxu0 %v1721
        %1781 = vmatpush1.bf16.msra.mxu0 %v1720
        %1782 = vmatprep.subr.bf16.mxu0 %v1717
        %1783 = vmatpush1.bf16.msra.mxu0 %v1716
        %1784 = vmatprep.subr.bf16.mxu0 %v1713
        %1785 = vmatpush1.bf16.msra.mxu0 %v1712
        %1786 = vmatprep.subr.bf16.mxu0 %v1709
        %1787 = vmatpush1.bf16.msra.mxu0 %v1708
        %1788 = vmatprep.subr.bf16.mxu0 0
        %1789 = vmatpush2.bf16.msra.mxu0 0
        %1790 = vmatprep.subr.bf16.mxu0 0
        %1791 = vmatpush2.bf16.msra.mxu0 0
        %1792 = vmatprep.subr.bf16.mxu0 0
        %1793 = vmatpush2.bf16.msra.mxu0 0
        %1794 = vmatprep.subr.bf16.mxu0 0
        %1795 = vmatpush2.bf16.msra.mxu0 0
        %1796 = vmatprep.subr.bf16.mxu0 0
        %1797 = vmatpush2.bf16.msra.mxu0 0
        %1798 = vmatprep.subr.bf16.mxu0 0
        %1799 = vmatpush2.bf16.msra.mxu0 0
        %1800 = vmatprep.subr.bf16.mxu0 0
        %1801 = vmatpush2.bf16.msra.mxu0 0
        %1802 = vmatprep.subr.bf16.mxu0 0
        %1803 = vmatpush2.bf16.msra.mxu0 0
        %1804 = vmatprep.mubr.bf16.mxu0 0
        %1805 = vmatmul.mubr.bf16.gmra.mxu0 %v1576
        %v1806 = vpop.f32.mrf.mxu0
        %v1807 = vadd.f32 0.0, %v1806
        %v1808 = vpop.f32.mrf.mxu0
        %v1809 = vadd.f32 0.0, %v1808
        %v1810 = vpop.f32.mrf.mxu0
        %v1811 = vadd.f32 0.0, %v1810
        %v1812 = vpop.f32.mrf.mxu0
        %v1813 = vadd.f32 0.0, %v1812
        %1814 = vmatprep.mubr.bf16.mxu0 0
        %1815 = vmatmul.mubr.bf16.gmra.mxu0 %v1577
        %v1816 = vpop.f32.mrf.mxu0
        %v1817 = vadd.f32 0.0, %v1816
        %v1818 = vpop.f32.mrf.mxu0
        %v1819 = vadd.f32 0.0, %v1818
        %v1820 = vpop.f32.mrf.mxu0
        %v1821 = vadd.f32 0.0, %v1820
        %v1822 = vpop.f32.mrf.mxu0
        %v1823 = vadd.f32 0.0, %v1822
        %1824 = vmatprep.mubr.bf16.mxu0 0
        %1825 = vmatmul.mubr.bf16.gmra.mxu0 %v1578
        %v1826 = vpop.f32.mrf.mxu0
        %v1827 = vadd.f32 0.0, %v1826
        %v1828 = vpop.f32.mrf.mxu0
        %v1829 = vadd.f32 0.0, %v1828
        %v1830 = vpop.f32.mrf.mxu0
        %v1831 = vadd.f32 0.0, %v1830
        %v1832 = vpop.f32.mrf.mxu0
        %v1833 = vadd.f32 0.0, %v1832
        %1834 = vmatprep.mubr.bf16.mxu0 0
        %1835 = vmatmul.mubr.bf16.gmra.mxu0 %v1579
        %v1836 = vpop.f32.mrf.mxu0
        %v1837 = vadd.f32 0.0, %v1836
        %v1838 = vpop.f32.mrf.mxu0
        %v1839 = vadd.f32 0.0, %v1838
        %v1840 = vpop.f32.mrf.mxu0
        %v1841 = vadd.f32 0.0, %v1840
        %v1842 = vpop.f32.mrf.mxu0
        %v1843 = vadd.f32 0.0, %v1842
        %1844 = vdwg.mxu0
        %1845 = vmatprep.subr.bf16.mxu0 %v1739
        %1846 = vmatpush1.bf16.msra.mxu0 %v1738
        %1847 = vmatprep.subr.bf16.mxu0 %v1735
        %1848 = vmatpush1.bf16.msra.mxu0 %v1734
        %1849 = vmatprep.subr.bf16.mxu0 %v1731
        %1850 = vmatpush1.bf16.msra.mxu0 %v1730
        %1851 = vmatprep.subr.bf16.mxu0 %v1727
        %1852 = vmatpush1.bf16.msra.mxu0 %v1726
        %1853 = vmatprep.subr.bf16.mxu0 %v1723
        %1854 = vmatpush1.bf16.msra.mxu0 %v1722
        %1855 = vmatprep.subr.bf16.mxu0 %v1719
        %1856 = vmatpush1.bf16.msra.mxu0 %v1718
        %1857 = vmatprep.subr.bf16.mxu0 %v1715
        %1858 = vmatpush1.bf16.msra.mxu0 %v1714
        %1859 = vmatprep.subr.bf16.mxu0 %v1711
        %1860 = vmatpush1.bf16.msra.mxu0 %v1710
        %1861 = vmatprep.subr.bf16.mxu0 0
        %1862 = vmatpush2.bf16.msra.mxu0 0
        %1863 = vmatprep.subr.bf16.mxu0 0
        %1864 = vmatpush2.bf16.msra.mxu0 0
        %1865 = vmatprep.subr.bf16.mxu0 0
        %1866 = vmatpush2.bf16.msra.mxu0 0
        %1867 = vmatprep.subr.bf16.mxu0 0
        %1868 = vmatpush2.bf16.msra.mxu0 0
        %1869 = vmatprep.subr.bf16.mxu0 0
        %1870 = vmatpush2.bf16.msra.mxu0 0
        %1871 = vmatprep.subr.bf16.mxu0 0
        %1872 = vmatpush2.bf16.msra.mxu0 0
        %1873 = vmatprep.subr.bf16.mxu0 0
        %1874 = vmatpush2.bf16.msra.mxu0 0
        %1875 = vmatprep.subr.bf16.mxu0 0
        %1876 = vmatpush2.bf16.msra.mxu0 0
        %1877 = vmatprep.mubr.bf16.mxu0 0
        %1878 = vmatmul.mubr.bf16.gmra.mxu0 %v1576
        %v1879 = vpop.f32.mrf.mxu0
        %v1880 = vadd.f32 0.0, %v1879
        %v1881 = vpop.f32.mrf.mxu0
        %v1882 = vadd.f32 0.0, %v1881
        %v1883 = vpop.f32.mrf.mxu0
        %v1884 = vadd.f32 0.0, %v1883
        %v1885 = vpop.f32.mrf.mxu0
        %v1886 = vadd.f32 0.0, %v1885
        %1887 = vmatprep.mubr.bf16.mxu0 0
        %1888 = vmatmul.mubr.bf16.gmra.mxu0 %v1577
        %v1889 = vpop.f32.mrf.mxu0
        %v1890 = vadd.f32 0.0, %v1889
        %v1891 = vpop.f32.mrf.mxu0
        %v1892 = vadd.f32 0.0, %v1891
        %v1893 = vpop.f32.mrf.mxu0
        %v1894 = vadd.f32 0.0, %v1893
        %v1895 = vpop.f32.mrf.mxu0
        %v1896 = vadd.f32 0.0, %v1895
        %1897 = vmatprep.mubr.bf16.mxu0 0
        %1898 = vmatmul.mubr.bf16.gmra.mxu0 %v1578
        %v1899 = vpop.f32.mrf.mxu0
        %v1900 = vadd.f32 0.0, %v1899
        %v1901 = vpop.f32.mrf.mxu0
        %v1902 = vadd.f32 0.0, %v1901
        %v1903 = vpop.f32.mrf.mxu0
        %v1904 = vadd.f32 0.0, %v1903
        %v1905 = vpop.f32.mrf.mxu0
        %v1906 = vadd.f32 0.0, %v1905
        %1907 = vmatprep.mubr.bf16.mxu0 0
        %1908 = vmatmul.mubr.bf16.gmra.mxu0 %v1579
        %v1909 = vpop.f32.mrf.mxu0
        %v1910 = vadd.f32 0.0, %v1909
        %v1911 = vpop.f32.mrf.mxu0
        %v1912 = vadd.f32 0.0, %v1911
        %v1913 = vpop.f32.mrf.mxu0
        %v1914 = vadd.f32 0.0, %v1913
        %v1915 = vpop.f32.mrf.mxu0
        %v1916 = vadd.f32 0.0, %v1915
        %1917 = vdwg.mxu0
        %v1918 = vxor.u32 %v1807, 2147483648
        %v1919 = vxor.u32 %v1809, 2147483648
        %v1920 = vxor.u32 %v1811, 2147483648
        %v1921 = vxor.u32 %v1813, 2147483648
        %v1922 = vxor.u32 %v1817, 2147483648
        %v1923 = vxor.u32 %v1819, 2147483648
        %v1924 = vxor.u32 %v1821, 2147483648
        %v1925 = vxor.u32 %v1823, 2147483648
        %v1926 = vxor.u32 %v1827, 2147483648
        %v1927 = vxor.u32 %v1829, 2147483648
        %v1928 = vxor.u32 %v1831, 2147483648
        %v1929 = vxor.u32 %v1833, 2147483648
        %v1930 = vxor.u32 %v1837, 2147483648
        %v1931 = vxor.u32 %v1839, 2147483648
        %v1932 = vxor.u32 %v1841, 2147483648
        %v1933 = vxor.u32 %v1843, 2147483648
        %v1934 = vmul.f32 %v1918, 1.442695
        %v1935 = vpow.pop %v1934
        %v1936 = vmul.f32 %v1919, 1.442695
        %v1937 = vpow.pop %v1936
        %v1938 = vmul.f32 %v1920, 1.442695
        %v1939 = vpow.pop %v1938
        %v1940 = vmul.f32 %v1921, 1.442695
        %v1941 = vpow.pop %v1940
        %v1942 = vmul.f32 %v1922, 1.442695
        %v1943 = vpow.pop %v1942
        %v1944 = vmul.f32 %v1923, 1.442695
        %v1945 = vpow.pop %v1944
        %v1946 = vmul.f32 %v1924, 1.442695
        %v1947 = vpow.pop %v1946
        %v1948 = vmul.f32 %v1925, 1.442695
        %v1949 = vpow.pop %v1948
        %v1950 = vmul.f32 %v1926, 1.442695
        %v1951 = vpow.pop %v1950
        %v1952 = vmul.f32 %v1927, 1.442695
        %v1953 = vpow.pop %v1952
        %v1954 = vmul.f32 %v1928, 1.442695
        %v1955 = vpow.pop %v1954
        %v1956 = vmul.f32 %v1929, 1.442695
        %v1957 = vpow.pop %v1956
        %v1958 = vmul.f32 %v1930, 1.442695
        %v1959 = vpow.pop %v1958
        %v1960 = vmul.f32 %v1931, 1.442695
        %v1961 = vpow.pop %v1960
        %v1962 = vmul.f32 %v1932, 1.442695
        %v1963 = vpow.pop %v1962
        %v1964 = vmul.f32 %v1933, 1.442695
        %v1965 = vpow.pop %v1964
        %v1966 = vadd.f32 %v1935, 1.0
        %v1967 = vadd.f32 %v1937, 1.0
        %v1968 = vadd.f32 %v1939, 1.0
        %v1969 = vadd.f32 %v1941, 1.0
        %v1970 = vadd.f32 %v1943, 1.0
        %v1971 = vadd.f32 %v1945, 1.0
        %v1972 = vadd.f32 %v1947, 1.0
        %v1973 = vadd.f32 %v1949, 1.0
        %v1974 = vadd.f32 %v1951, 1.0
        %v1975 = vadd.f32 %v1953, 1.0
        %v1976 = vadd.f32 %v1955, 1.0
        %v1977 = vadd.f32 %v1957, 1.0
        %v1978 = vadd.f32 %v1959, 1.0
        %v1979 = vadd.f32 %v1961, 1.0
        %v1980 = vadd.f32 %v1963, 1.0
        %v1981 = vadd.f32 %v1965, 1.0
        %v1982 = vrcp.pop %v1966
        %v1983 = vmul.f32 1.0, %v1982
        %v1984 = vrcp.pop %v1967
        %v1985 = vmul.f32 1.0, %v1984
        %v1986 = vrcp.pop %v1968
        %v1987 = vmul.f32 1.0, %v1986
        %v1988 = vrcp.pop %v1969
        %v1989 = vmul.f32 1.0, %v1988
        %v1990 = vrcp.pop %v1970
        %v1991 = vmul.f32 1.0, %v1990
        %v1992 = vrcp.pop %v1971
        %v1993 = vmul.f32 1.0, %v1992
        %v1994 = vrcp.pop %v1972
        %v1995 = vmul.f32 1.0, %v1994
        %v1996 = vrcp.pop %v1973
        %v1997 = vmul.f32 1.0, %v1996
        %v1998 = vrcp.pop %v1974
        %v1999 = vmul.f32 1.0, %v1998
        %v2000 = vrcp.pop %v1975
        %v2001 = vmul.f32 1.0, %v2000
        %v2002 = vrcp.pop %v1976
        %v2003 = vmul.f32 1.0, %v2002
        %v2004 = vrcp.pop %v1977
        %v2005 = vmul.f32 1.0, %v2004
        %v2006 = vrcp.pop %v1978
        %v2007 = vmul.f32 1.0, %v2006
        %v2008 = vrcp.pop %v1979
        %v2009 = vmul.f32 1.0, %v2008
        %v2010 = vrcp.pop %v1980
        %v2011 = vmul.f32 1.0, %v2010
        %v2012 = vrcp.pop %v1981
        %v2013 = vmul.f32 1.0, %v2012
        %v2014 = vmul.f32 %v1807, %v1983
        %v2015 = vmul.f32 %v1809, %v1985
        %v2016 = vmul.f32 %v1811, %v1987
        %v2017 = vmul.f32 %v1813, %v1989
        %v2018 = vmul.f32 %v1817, %v1991
        %v2019 = vmul.f32 %v1819, %v1993
        %v2020 = vmul.f32 %v1821, %v1995
        %v2021 = vmul.f32 %v1823, %v1997
        %v2022 = vmul.f32 %v1827, %v1999
        %v2023 = vmul.f32 %v1829, %v2001
        %v2024 = vmul.f32 %v1831, %v2003
        %v2025 = vmul.f32 %v1833, %v2005
        %v2026 = vmul.f32 %v1837, %v2007
        %v2027 = vmul.f32 %v1839, %v2009
        %v2028 = vmul.f32 %v1841, %v2011
        %v2029 = vmul.f32 %v1843, %v2013
        %v2030 = vmul.f32 %v2014, %v1880
        %v2031 = vmul.f32 %v2015, %v1882
        %v2032 = vmul.f32 %v2016, %v1884
        %v2033 = vmul.f32 %v2017, %v1886
        %v2034 = vmul.f32 %v2018, %v1890
        %v2035 = vmul.f32 %v2019, %v1892
        %v2036 = vmul.f32 %v2020, %v1894
        %v2037 = vmul.f32 %v2021, %v1896
        %v2038 = vmul.f32 %v2022, %v1900
        %v2039 = vmul.f32 %v2023, %v1902
        %v2040 = vmul.f32 %v2024, %v1904
        %v2041 = vmul.f32 %v2025, %v1906
        %v2042 = vmul.f32 %v2026, %v1910
        %v2043 = vmul.f32 %v2027, %v1912
        %v2044 = vmul.f32 %v2028, %v1914
        %v2045 = vmul.f32 %v2029, %v1916
        %v2046 = vpack.c.bf16 %v2032, %v2030
        %v2047 = vpack.c.bf16 %v2033, %v2031
        %v2048 = vpack.c.bf16 %v2036, %v2034
        %v2049 = vpack.c.bf16 %v2037, %v2035
        %v2050 = vpack.c.bf16 %v2040, %v2038
        %v2051 = vpack.c.bf16 %v2041, %v2039
        %v2052 = vpack.c.bf16 %v2044, %v2042
        %v2053 = vpack.c.bf16 %v2045, %v2043
        %v2054 = vld [vmem:[#allocation16] sm:$0xf]
        %v2055 = vld [vmem:[#allocation16 + $0x4] sm:$0xf]
        %v2056 = vld [vmem:[#allocation16 + $0x8] sm:$0xf]
        %v2057 = vld [vmem:[#allocation16 + $0xc] sm:$0xf]
        %v2058 = vld [vmem:[#allocation16 + $0x10] sm:$0xf]
        %v2059 = vld [vmem:[#allocation16 + $0x14] sm:$0xf]
        %v2060 = vld [vmem:[#allocation16 + $0x18] sm:$0xf]
        %v2061 = vld [vmem:[#allocation16 + $0x1c] sm:$0xf]
        %v2062 = vld [vmem:[#allocation16 + $0x20] sm:$0xf]
        %v2063 = vld [vmem:[#allocation16 + $0x24] sm:$0xf]
        %v2064 = vld [vmem:[#allocation16 + $0x28] sm:$0xf]
        %v2065 = vld [vmem:[#allocation16 + $0x2c] sm:$0xf]
        %v2066 = vld [vmem:[#allocation16 + $0x30] sm:$0xf]
        %v2067 = vld [vmem:[#allocation16 + $0x34] sm:$0xf]
        %v2068 = vld [vmem:[#allocation16 + $0x38] sm:$0xf]
        %v2069 = vld [vmem:[#allocation16 + $0x3c] sm:$0xf]
        %v2070 = vld [vmem:[#allocation16 + $0x40] sm:$0xf]
        %v2071 = vld [vmem:[#allocation16 + $0x44] sm:$0xf]
        %v2072 = vld [vmem:[#allocation16 + $0x48] sm:$0xf]
        %v2073 = vld [vmem:[#allocation16 + $0x4c] sm:$0xf]
        %v2074 = vld [vmem:[#allocation16 + $0x50] sm:$0xf]
        %v2075 = vld [vmem:[#allocation16 + $0x54] sm:$0xf]
        %v2076 = vld [vmem:[#allocation16 + $0x58] sm:$0xf]
        %v2077 = vld [vmem:[#allocation16 + $0x5c] sm:$0xf]
        %v2078 = vld [vmem:[#allocation16 + $0x60] sm:$0xf]
        %v2079 = vld [vmem:[#allocation16 + $0x64] sm:$0xf]
        %v2080 = vld [vmem:[#allocation16 + $0x68] sm:$0xf]
        %v2081 = vld [vmem:[#allocation16 + $0x6c] sm:$0xf]
        %v2082 = vld [vmem:[#allocation16 + $0x70] sm:$0xf]
        %v2083 = vld [vmem:[#allocation16 + $0x74] sm:$0xf]
        %v2084 = vld [vmem:[#allocation16 + $0x78] sm:$0xf]
        %v2085 = vld [vmem:[#allocation16 + $0x7c] sm:$0xf]
        %v2118 = vunpack.c.l.b16 %v2054
        %v2119 = vunpack.c.l.b16 %v2055
        %v2120 = vunpack.c.l.b16 %v2056
        %v2121 = vunpack.c.l.b16 %v2057
        %v2122 = vunpack.c.l.b16 %v2058
        %v2123 = vunpack.c.l.b16 %v2059
        %v2124 = vunpack.c.l.b16 %v2060
        %v2125 = vunpack.c.l.b16 %v2061
        %v2126 = vunpack.c.l.b16 %v2062
        %v2127 = vunpack.c.l.b16 %v2063
        %v2128 = vunpack.c.l.b16 %v2064
        %v2129 = vunpack.c.l.b16 %v2065
        %v2130 = vunpack.c.l.b16 %v2066
        %v2131 = vunpack.c.l.b16 %v2067
        %v2132 = vunpack.c.l.b16 %v2068
        %v2133 = vunpack.c.l.b16 %v2069
        %v2134 = vunpack.c.l.b16 %v2070
        %v2135 = vunpack.c.l.b16 %v2071
        %v2136 = vunpack.c.l.b16 %v2072
        %v2137 = vunpack.c.l.b16 %v2073
        %v2138 = vunpack.c.l.b16 %v2074
        %v2139 = vunpack.c.l.b16 %v2075
        %v2140 = vunpack.c.l.b16 %v2076
        %v2141 = vunpack.c.l.b16 %v2077
        %v2142 = vunpack.c.l.b16 %v2078
        %v2143 = vunpack.c.l.b16 %v2079
        %v2144 = vunpack.c.l.b16 %v2080
        %v2145 = vunpack.c.l.b16 %v2081
        %v2146 = vunpack.c.l.b16 %v2082
        %v2147 = vunpack.c.l.b16 %v2083
        %v2148 = vunpack.c.l.b16 %v2084
        %v2149 = vunpack.c.l.b16 %v2085
        %v2150 = vpack.c.b16 %v2119, %v2118
        %v2151 = vpack.c.b16 %v2121, %v2120
        %v2152 = vpack.c.b16 %v2123, %v2122
        %v2153 = vpack.c.b16 %v2125, %v2124
        %v2154 = vpack.c.b16 %v2127, %v2126
        %v2155 = vpack.c.b16 %v2129, %v2128
        %v2156 = vpack.c.b16 %v2131, %v2130
        %v2157 = vpack.c.b16 %v2133, %v2132
        %v2158 = vpack.c.b16 %v2135, %v2134
        %v2159 = vpack.c.b16 %v2137, %v2136
        %v2160 = vpack.c.b16 %v2139, %v2138
        %v2161 = vpack.c.b16 %v2141, %v2140
        %v2162 = vpack.c.b16 %v2143, %v2142
        %v2163 = vpack.c.b16 %v2145, %v2144
        %v2164 = vpack.c.b16 %v2147, %v2146
        %v2165 = vpack.c.b16 %v2149, %v2148
        %2182 = vmatprep.subr.bf16.mxu0 0
        %2183 = vmatpush1.bf16.msra.mxu0 %v2157
        %2184 = vmatprep.subr.bf16.mxu0 0
        %2185 = vmatpush1.bf16.msra.mxu0 %v2156
        %2186 = vmatprep.subr.bf16.mxu0 0
        %2187 = vmatpush1.bf16.msra.mxu0 %v2155
        %2188 = vmatprep.subr.bf16.mxu0 0
        %2189 = vmatpush1.bf16.msra.mxu0 %v2154
        %2190 = vmatprep.subr.bf16.mxu0 0
        %2191 = vmatpush1.bf16.msra.mxu0 %v2153
        %2192 = vmatprep.subr.bf16.mxu0 0
        %2193 = vmatpush1.bf16.msra.mxu0 %v2152
        %2194 = vmatprep.subr.bf16.mxu0 0
        %2195 = vmatpush1.bf16.msra.mxu0 %v2151
        %2196 = vmatprep.subr.bf16.mxu0 0
        %2197 = vmatpush1.bf16.msra.mxu0 %v2150
        %2198 = vmatprep.subr.bf16.mxu0 0
        %2199 = vmatpush2.bf16.msra.mxu0 %v2165
        %2200 = vmatprep.subr.bf16.mxu0 0
        %2201 = vmatpush2.bf16.msra.mxu0 %v2164
        %2202 = vmatprep.subr.bf16.mxu0 0
        %2203 = vmatpush2.bf16.msra.mxu0 %v2163
        %2204 = vmatprep.subr.bf16.mxu0 0
        %2205 = vmatpush2.bf16.msra.mxu0 %v2162
        %2206 = vmatprep.subr.bf16.mxu0 0
        %2207 = vmatpush2.bf16.msra.mxu0 %v2161
        %2208 = vmatprep.subr.bf16.mxu0 0
        %2209 = vmatpush2.bf16.msra.mxu0 %v2160
        %2210 = vmatprep.subr.bf16.mxu0 0
        %2211 = vmatpush2.bf16.msra.mxu0 %v2159
        %2212 = vmatprep.subr.bf16.mxu0 0
        %2213 = vmatpush2.bf16.msra.mxu0 %v2158
        %2214 = vmatprep.mubr.bf16.mxu0 %v2047
        %2215 = vmatmul.mubr.bf16.gmra.mxu0 %v2046
        %v2216 = vpop.f32.mrf.mxu0
        %v2217 = vadd.f32 0.0, %v2216
        %v2218 = vpop.f32.mrf.mxu0
        %v2219 = vpop.f32.mrf.mxu0
        %v2220 = vadd.f32 0.0, %v2219
        %v2221 = vpop.f32.mrf.mxu0
        %2222 = vmatprep.mubr.bf16.mxu0 %v2049
        %2223 = vmatmul.mubr.bf16.gmra.mxu0 %v2048
        %v2224 = vpop.f32.mrf.mxu0
        %v2225 = vadd.f32 0.0, %v2224
        %v2226 = vpop.f32.mrf.mxu0
        %v2227 = vpop.f32.mrf.mxu0
        %v2228 = vadd.f32 0.0, %v2227
        %v2229 = vpop.f32.mrf.mxu0
        %2230 = vmatprep.mubr.bf16.mxu0 %v2051
        %2231 = vmatmul.mubr.bf16.gmra.mxu0 %v2050
        %v2232 = vpop.f32.mrf.mxu0
        %v2233 = vadd.f32 0.0, %v2232
        %v2234 = vpop.f32.mrf.mxu0
        %v2235 = vpop.f32.mrf.mxu0
        %v2236 = vadd.f32 0.0, %v2235
        %v2237 = vpop.f32.mrf.mxu0
        %2238 = vmatprep.mubr.bf16.mxu0 %v2053
        %2239 = vmatmul.mubr.bf16.gmra.mxu0 %v2052
        %v2240 = vpop.f32.mrf.mxu0
        %v2241 = vadd.f32 0.0, %v2240
        %v2242 = vpop.f32.mrf.mxu0
        %v2243 = vpop.f32.mrf.mxu0
        %v2244 = vadd.f32 0.0, %v2243
        %v2245 = vpop.f32.mrf.mxu0
        %2246 = vdwg.mxu0
        %v2247 = vadd.f32 %v1512, %v2217
        %v2248 = vadd.f32 %v1513, %v2220
        %v2249 = vadd.f32 %v1514, %v2225
        %v2250 = vadd.f32 %v1515, %v2228
        %v2251 = vadd.f32 %v1516, %v2233
        %v2252 = vadd.f32 %v1517, %v2236
        %v2253 = vadd.f32 %v1518, %v2241
        %v2254 = vadd.f32 %v1519, %v2244
        %2255 = vst [vmem:[%s409] sm:$0xff] %v2247
        %2256 = vst [vmem:[%s409 + $0x8] sm:$0xff] %v2248
        %2257 = vst [vmem:[%s409 + $0x10] sm:$0xff] %v2249
        %2258 = vst [vmem:[%s409 + $0x18] sm:$0xff] %v2250
        %2259 = vst [vmem:[%s409 + $0x20] sm:$0xff] %v2251
        %2260 = vst [vmem:[%s409 + $0x28] sm:$0xff] %v2252
        %2261 = vst [vmem:[%s409 + $0x30] sm:$0xff] %v2253
        %2262 = vst [vmem:[%s409 + $0x38] sm:$0xff] %v2254
        %s2263 = sand.u32 %s209, 1
        %s2264 = scalar_lea.sflag [#allocation7], %s2263
        %s2265 = sand.u32 %s209, 1
        %s2266 = smul.addr %s2265, 64
        %s2267 = scalar_lea.vmem [#allocation17], %s2266
        // Predicated region
        $region88: #{tpu_custom_call.1} parent=51 // pred_check
          %p2268 = pneg %p219
        $region89: #{tpu_custom_call.1} parent=51 // pred_check_branch
          %2270 = sbr.rel (%p2268) target = $region91
        $region90: #{tpu_custom_call.1} parent=51 // pred_region
          %s2271 = smul.u32 2, %s28
          %s2273 = ssub.s32 1024, 1024
          %2274 = vsyncadd %s2264, %s2273
          %s2275 = smul.addr %s2271, 4
          %s2276 = smul.addr %s2275, 128
          %s2277 = scalar_lea.hbm %s8, %s2276
          %s2278 = sshll.u32 %s2267, 4
          %s2279 = int_to_ptr.vmem [resolvable:$true] %s2278
          %2284 = dma.vmem_to_hbm [thread:$0]  %s2279, 1024, %s2277, %s2264, 128, 128, 8
        $region91: #{tpu_custom_call.1} parent=51 // pred_fallthru
          _
      $region52: #{tpu_custom_call.1} parent=5 // pred_fallthru
        _
      %p2285 = scmp.le.s32.totalorder 2, %s23
      // Predicated region
      $region92: #{tpu_custom_call.1} parent=5 // pred_check
        %p2286 = pneg %p2285
      $region93: #{tpu_custom_call.1} parent=5 // pred_check_branch
        %2288 = sbr.rel (%p2286) target = $region95
      $region94: #{tpu_custom_call.1} parent=5 // pred_region
        %s2289 = ssub.s32 %s23, 2
        // Predicated region
        $region96: #{tpu_custom_call.1} parent=94 // pred_check
          %p2290 = pneg %p225
        $region97: #{tpu_custom_call.1} parent=94 // pred_check_branch
          %2292 = sbr.rel (%p2290) target = $region99
        $region98: #{tpu_custom_call.1} parent=94 // pred_region
          %s2293 = sand.u32 %s210, 1
          %s2294 = scalar_lea.sflag [#allocation7], %s2293
          %s2295 = sand.u32 %s210, 1
          %s2296 = smul.addr %s2295, 64
          %s2297 = scalar_lea.vmem [#allocation17], %s2296
          %2298 = dma.done %s2294, 1024
        $region99: #{tpu_custom_call.1} parent=94 // pred_fallthru
          _
      $region95: #{tpu_custom_call.1} parent=5 // pred_fallthru
        _
    $region6: #{tpu_custom_call.1} parent=1 // loop_footer
      %s27 = sadd.s32 1, %s23
    $region7: #{tpu_custom_call.1} parent=1 // loop_footer_branch
      %22 = sbr.rel target = $region3
    $region8: #{tpu_custom_call.1} parent=1 // loop_exit
      _
    %2299 = vsyncpa [#allocation6], 1
    %s2300 = scalar_lea.sflag [#allocation6], 1
    %2301 = vsyncpa %s2300, 1
    %2302 = vsyncpa [#allocation9], 1
    %2303 = vsyncpa [#allocation12], 1
    %2304 = vsyncpa [#allocation15], 1
    %2305 = vsyncpa [#allocation7], 1
    %s2306 = scalar_lea.sflag [#allocation7], 1
    %2307 = vsyncpa %s2306, 1

</llo_original>
